<compile_context>
chip_gen: v7x
topology: tpu7x:2x2x1
jax: 0.10.0
libtpu: 0.0.40
codegen_flags: <defaults>
</compile_context>

<pallas_src>
import functools

import jax
import jax.numpy as jnp
from jax.experimental import pallas as pl
from jax.experimental.pallas import tpu as pltpu


def _eligibility_rollout_kernel(
    x_ref, w_ref, b_ref, alpha_ref, heb0_ref, elig0_ref,
    wfi_ref, wfo_ref, bfo_ref, scal_ref,
    post_ref, heb_ref, elig_ref, *, clip):
  t = pl.program_id(0)

  # Seed the resident trace accumulators from the (aliased) inputs.
  @pl.when(t == 0)
  def _():
    heb_ref[...] = heb0_ref[...]
    elig_ref[...] = elig0_ref[...]

  x = x_ref[...]          # (Hp, Hp)  pre-synaptic activity for this step
  heb = heb_ref[...]
  elig = elig_ref[...]

  # fixed weights: nn.Linear(input_size, output_size)
  fixed = jnp.dot(x, w_ref[...], preferred_element_type=jnp.float32) + b_ref[...]
  # plastic weights: x @ (alpha_plasticity * hebbian_trace)
  plastic = jnp.dot(x, alpha_ref[...] * heb, preferred_element_type=jnp.float32)
  post = jnp.tanh(fixed + plastic)                  # activation = tanh
  post_ref[...] = post

  # update_trace: modulation_fan_out(tanh(modulation_fan_in(post)))
  # Rank-1 projections done on VPU/XLU/EUP instead of burning MXU passes:
  #   fan_in : (B,H)@(H,1)  -> elementwise multiply + lane reduction
  #   fan_out: (B,1)@(1,H)  -> broadcast multiply
  bfi = scal_ref[1]
  mod_in = jnp.tanh(
      jnp.sum(post * wfi_ref[...], axis=-1, keepdims=True) + bfi)   # (Hp, 1)
  mod = mod_in * wfo_ref[...] + bfo_ref[...]                        # (Hp, Hp)
  heb_ref[...] = jnp.clip(heb + mod * elig, -clip, clip)

  eta = scal_ref[0]
  elig_ref[...] = (1.0 - eta) * elig + eta * jnp.dot(
      x, post, preferred_element_type=jnp.float32)


@functools.partial(jax.jit, static_argnames=("clip",))
def eligibility_rollout(xs, params, hebbian, eligibility, *, clip):
  """Applies the 'eligibility' module forward T times (xs: (T, B, H)).

  Returns (post_synaptic (T,B,H), new_hebbian (H,H), new_eligibility (H,H)).
  For T == 1 this is exactly the module's forward() pass.
  """
  T, B, IN = xs.shape
  H, OUT = hebbian.shape
  if not (B == IN == OUT == H):
    raise ValueError("eligibility module requires batch == input == output size")

  Hp = pl.cdiv(H, 128) * 128    # lane-dense padding (multiple of 128, >= 8 rows)

  def pad2(a):
    return jnp.pad(a.astype(jnp.float32),
                   ((0, Hp - a.shape[0]), (0, Hp - a.shape[1])))

  def pad_row(a):               # (n,) -> (1, Hp)
    a = a.reshape(1, -1).astype(jnp.float32)
    return jnp.pad(a, ((0, 0), (0, Hp - a.shape[1])))

  xs_p    = jnp.pad(xs.astype(jnp.float32),
                    ((0, 0), (0, Hp - B), (0, Hp - IN)))
  w_p     = pad2(params["weight"].T)                 # (IN, OUT) layout
  b_p     = pad_row(params["bias"])
  alpha_p = pad2(params["alpha"])
  heb_p   = pad2(hebbian)
  elig_p  = pad2(eligibility)
  wfi_p   = pad_row(params["w_fan_in"].reshape(-1))  # Linear(out,1).weight -> row
  wfo_p   = pad_row(params["w_fan_out"].reshape(-1)) # Linear(1,out).weight -> row
  bfo_p   = pad_row(params["b_fan_out"])
  scalars = jnp.stack([params["eta"].reshape(()),
                       params["b_fan_in"].reshape(())]).astype(jnp.float32)

  kernel = functools.partial(_eligibility_rollout_kernel, clip=float(clip))

  full2 = pl.BlockSpec((Hp, Hp), lambda t: (0, 0))        # resident / weights
  row   = pl.BlockSpec((1, Hp), lambda t: (0, 0))
  step3 = lambda: pl.BlockSpec((None, Hp, Hp), lambda t: (t, 0, 0))

  post_p, heb_new_p, elig_new_p = pl.pallas_call(
      kernel,
      grid=(T,),
      in_specs=[
          step3(),   # 0: xs        (per-step pipelined block)
          full2,     # 1: W         (fetched once)
          row,       # 2: bias
          full2,     # 3: alpha
          full2,     # 4: hebbian_0     (aliased -> output 1)
          full2,     # 5: eligibility_0 (aliased -> output 2)
          row,       # 6: fan_in weight
          row,       # 7: fan_out weight
          row,       # 8: fan_out bias
          pl.BlockSpec(memory_space=pltpu.MemorySpace.SMEM),  # 9: [eta, b_fan_in]
      ],
      out_specs=(
          step3(),   # post per step (lane-dense writes)
          full2,     # hebbian trace  (resident across the grid)
          full2,     # eligibility trace
      ),
      out_shape=(
          jax.ShapeDtypeStruct((T, Hp, Hp), jnp.float32),
          jax.ShapeDtypeStruct((Hp, Hp), jnp.float32),
          jax.ShapeDtypeStruct((Hp, Hp), jnp.float32),
      ),
      input_output_aliases={4: 1, 5: 2},
      compiler_params=pltpu.CompilerParams(
          dimension_semantics=("arbitrary",)),   # sequential recurrence over T
  )(xs_p, w_p, b_p, alpha_p, heb_p, elig_p, wfi_p, wfo_p, bfo_p, scalars)

  return post_p[:, :B, :OUT], heb_new_p[:H, :OUT], elig_new_p[:H, :OUT]


def _reference_rollout(xs, params, heb, elig, clip):
  """Pure-JAX reference: the PyTorch module stepped T times."""
  w_t = params["weight"].T
  eta = params["eta"][0]
  posts = []
  for t in range(xs.shape[0]):
    x = xs[t]
    fixed = x @ w_t + params["bias"][None, :]
    plastic = x @ (params["alpha"] * heb)
    post = jnp.tanh(fixed + plastic)
    mod = (jnp.tanh(post @ params["w_fan_in"].T + params["b_fan_in"])
           @ params["w_fan_out"].T + params["b_fan_out"][None, :])
    heb = jnp.clip(heb + mod * elig, -clip, clip)
    elig = (1.0 - eta) * elig + eta * (x @ post)
    posts.append(post)
  return jnp.stack(posts), heb, elig


if __name__ == "__main__":
  H = 32       # batch == input_size == output_size (required by the module math)
  T = 4        # fused timesteps in one pallas_call
  CLIP = 2.0   # module_metadata['clip']

  key = jax.random.PRNGKey(0)
  ks = jax.random.split(key, 9)

  xs = jax.random.normal(ks[0], (T, H, H), dtype=jnp.float32) * 0.5

  # Parameters in the PyTorch nn.Linear / nn.Parameter layouts.
  params = {
      "weight":    jax.random.normal(ks[1], (H, H), dtype=jnp.float32) * 0.1,  # Linear(in,out).weight (out,in)
      "bias":      jax.random.normal(ks[2], (H,), dtype=jnp.float32) * 0.1,
      "alpha":     jnp.ones((H, H), dtype=jnp.float32),                        # alpha_plasticity
      "w_fan_in":  jax.random.normal(ks[3], (1, H), dtype=jnp.float32) * 0.1,  # Linear(out,1).weight
      "b_fan_in":  jax.random.normal(ks[4], (1,), dtype=jnp.float32) * 0.1,
      "w_fan_out": jax.random.normal(ks[5], (H, 1), dtype=jnp.float32) * 0.1,  # Linear(1,out).weight
      "b_fan_out": jax.random.normal(ks[6], (H,), dtype=jnp.float32) * 0.1,
      "eta":       jnp.full((1,), 0.7, dtype=jnp.float32),                     # eligibility_eta
  }

  # Traces start at zero in the module; nonzero eligibility exercises the
  # plastic / clamp paths from the very first step.
  hebbian = jnp.zeros((H, H), dtype=jnp.float32)
  eligibility = jax.random.normal(ks[7], (H, H), dtype=jnp.float32) * 0.05

  # Compute the reference first (the kernel aliases the trace inputs).
  post_r, heb_r, elig_r = jax.block_until_ready(
      _reference_rollout(xs, params, hebbian, eligibility, CLIP))

  post, heb_new, elig_new = jax.block_until_ready(
      eligibility_rollout(xs, params, hebbian, eligibility, clip=CLIP))

  assert jnp.allclose(post, post_r, atol=1e-4, rtol=1e-4)
  assert jnp.allclose(heb_new, heb_r, atol=1e-4, rtol=1e-4)
  assert jnp.allclose(elig_new, elig_r, atol=1e-4, rtol=1e-4)

  print("KERNEL_OK")
</pallas_src>

<mosaic_0001>
module attributes {stable_mosaic.version = 11 : i64} {
  func.func @_eligibility_rollout_kernel(%arg0: i32, %arg1: memref<1x128x128xf32, #tpu.memory_space<vmem>>, %arg2: memref<128x128xf32, #tpu.memory_space<vmem>>, %arg3: memref<1x128xf32, #tpu.memory_space<vmem>>, %arg4: memref<128x128xf32, #tpu.memory_space<vmem>>, %arg5: memref<128x128xf32, #tpu.memory_space<vmem>>, %arg6: memref<128x128xf32, #tpu.memory_space<vmem>>, %arg7: memref<1x128xf32, #tpu.memory_space<vmem>>, %arg8: memref<1x128xf32, #tpu.memory_space<vmem>>, %arg9: memref<1x128xf32, #tpu.memory_space<vmem>>, %arg10: memref<2xf32, #tpu.memory_space<smem>>, %arg11: memref<1x128x128xf32, #tpu.memory_space<vmem>>, %arg12: memref<128x128xf32, #tpu.memory_space<vmem>>, %arg13: memref<128x128xf32, #tpu.memory_space<vmem>>) attributes {dimension_semantics = [#tpu.dimension_semantics<arbitrary>], iteration_bounds = array<i64: 4>, scalar_prefetch = 0 : i64, scratch_operands = 0 : i64, tpu.core_type = #tpu.core_type<tc>, window_params = [{transform_indices = @transform_0, window_bounds = array<i64: 1, 128, 128>}, {pipeline_mode = #tpu.pipeline_mode<synchronous>, transform_indices = @transform_1, window_bounds = array<i64: 128, 128>}, {pipeline_mode = #tpu.pipeline_mode<synchronous>, transform_indices = @transform_2, window_bounds = array<i64: 1, 128>}, {pipeline_mode = #tpu.pipeline_mode<synchronous>, transform_indices = @transform_3, window_bounds = array<i64: 128, 128>}, {pipeline_mode = #tpu.pipeline_mode<synchronous>, transform_indices = @transform_4, window_bounds = array<i64: 128, 128>}, {pipeline_mode = #tpu.pipeline_mode<synchronous>, transform_indices = @transform_5, window_bounds = array<i64: 128, 128>}, {pipeline_mode = #tpu.pipeline_mode<synchronous>, transform_indices = @transform_6, window_bounds = array<i64: 1, 128>}, {pipeline_mode = #tpu.pipeline_mode<synchronous>, transform_indices = @transform_7, window_bounds = array<i64: 1, 128>}, {pipeline_mode = #tpu.pipeline_mode<synchronous>, transform_indices = @transform_8, window_bounds = array<i64: 1, 128>}, {transform_indices = @transform_9, window_bounds = array<i64: 2>}, {transform_indices = @transform_10, window_bounds = array<i64: 1, 128, 128>}, {pipeline_mode = #tpu.pipeline_mode<synchronous>, transform_indices = @transform_11, window_bounds = array<i64: 128, 128>}, {pipeline_mode = #tpu.pipeline_mode<synchronous>, transform_indices = @transform_12, window_bounds = array<i64: 128, 128>}]} {
    %c0_i32 = arith.constant 0 : i32
    %0 = arith.cmpi eq, %arg0, %c0_i32 : i32
    %1 = arith.extui %0 : i1 to i32
    %c0_i32_0 = arith.constant 0 : i32
    %2 = arith.cmpi ne, %1, %c0_i32_0 : i32
    scf.if %2 {
      %c0_33 = arith.constant 0 : index
      %c0_34 = arith.constant 0 : index
      %52 = vector.load %arg5[%c0_33, %c0_34] : memref<128x128xf32, #tpu.memory_space<vmem>>, vector<128x128xf32>
      %c0_35 = arith.constant 0 : index
      %c0_36 = arith.constant 0 : index
      %53 = vector.load %arg12[%c0_35, %c0_36] : memref<128x128xf32, #tpu.memory_space<vmem>>, vector<128x128xf32>
      tpu.vector_store %arg12[%c0_35, %c0_36], %52 {strides = array<i32>} : memref<128x128xf32, #tpu.memory_space<vmem>>, vector<128x128xf32>,
      %c0_37 = arith.constant 0 : index
      %c0_38 = arith.constant 0 : index
      %54 = vector.load %arg6[%c0_37, %c0_38] : memref<128x128xf32, #tpu.memory_space<vmem>>, vector<128x128xf32>
      %c0_39 = arith.constant 0 : index
      %c0_40 = arith.constant 0 : index
      %55 = vector.load %arg13[%c0_39, %c0_40] : memref<128x128xf32, #tpu.memory_space<vmem>>, vector<128x128xf32>
      tpu.vector_store %arg13[%c0_39, %c0_40], %54 {strides = array<i32>} : memref<128x128xf32, #tpu.memory_space<vmem>>, vector<128x128xf32>,
    } else {
    }
    %c0 = arith.constant 0 : index
    %c0_1 = arith.constant 0 : index
    %c0_2 = arith.constant 0 : index
    %3 = vector.load %arg1[%c0, %c0_1, %c0_2] : memref<1x128x128xf32, #tpu.memory_space<vmem>>, vector<1x128x128xf32>
    %4 = vector.shape_cast %3 : vector<1x128x128xf32> to vector<128x128xf32>
    %c0_3 = arith.constant 0 : index
    %c0_4 = arith.constant 0 : index
    %5 = vector.load %arg12[%c0_3, %c0_4] : memref<128x128xf32, #tpu.memory_space<vmem>>, vector<128x128xf32>
    %c0_5 = arith.constant 0 : index
    %c0_6 = arith.constant 0 : index
    %6 = vector.load %arg13[%c0_5, %c0_6] : memref<128x128xf32, #tpu.memory_space<vmem>>, vector<128x128xf32>
    %c0_7 = arith.constant 0 : index
    %c0_8 = arith.constant 0 : index
    %7 = vector.load %arg2[%c0_7, %c0_8] : memref<128x128xf32, #tpu.memory_space<vmem>>, vector<128x128xf32>
    %cst = arith.constant dense<0.000000e+00> : vector<128x128xf32>
    %8 = tpu.matmul %4, %7, %cst {dimension_numbers = #tpu.dot_dimension_numbers<[1], [0], [0], [1], [0, 0, 1, 1], [], []>} : vector<128x128xf32>, vector<128x128xf32>, vector<128x128xf32> -> vector<128x128xf32>
    %c0_9 = arith.constant 0 : index
    %c0_10 = arith.constant 0 : index
    %9 = vector.load %arg3[%c0_9, %c0_10] : memref<1x128xf32, #tpu.memory_space<vmem>>, vector<1x128xf32>
    %10 = vector.broadcast %9 : vector<1x128xf32> to vector<128x128xf32>
    %11 = arith.addf %8, %10 : vector<128x128xf32>
    %c0_11 = arith.constant 0 : index
    %c0_12 = arith.constant 0 : index
    %12 = vector.load %arg4[%c0_11, %c0_12] : memref<128x128xf32, #tpu.memory_space<vmem>>, vector<128x128xf32>
    %13 = arith.mulf %12, %5 : vector<128x128xf32>
    %cst_13 = arith.constant dense<0.000000e+00> : vector<128x128xf32>
    %14 = tpu.matmul %4, %13, %cst_13 {dimension_numbers = #tpu.dot_dimension_numbers<[1], [0], [0], [1], [0, 0, 1, 1], [], []>} : vector<128x128xf32>, vector<128x128xf32>, vector<128x128xf32> -> vector<128x128xf32>
    %15 = arith.addf %11, %14 : vector<128x128xf32>
    %16 = math.tanh %15 : vector<128x128xf32>
    %c0_14 = arith.constant 0 : index
    %c0_15 = arith.constant 0 : index
    %c0_16 = arith.constant 0 : index
    %17 = vector.load %arg11[%c0_14, %c0_15, %c0_16] : memref<1x128x128xf32, #tpu.memory_space<vmem>>, vector<1x128x128xf32>
    %18 = vector.shape_cast %17 : vector<1x128x128xf32> to vector<128x128xf32>
    %19 = vector.shape_cast %16 : vector<128x128xf32> to vector<1x128x128xf32>
    tpu.vector_store %arg11[%c0_14, %c0_15, %c0_16], %19 {strides = array<i32>} : memref<1x128x128xf32, #tpu.memory_space<vmem>>, vector<1x128x128xf32>,
    %c1 = arith.constant 1 : index
    %20 = memref.load %arg10[%c1] : memref<2xf32, #tpu.memory_space<smem>>
    %c0_17 = arith.constant 0 : index
    %c0_18 = arith.constant 0 : index
    %21 = vector.load %arg7[%c0_17, %c0_18] : memref<1x128xf32, #tpu.memory_space<vmem>>, vector<1x128xf32>
    %22 = vector.broadcast %21 : vector<1x128xf32> to vector<128x128xf32>
    %23 = arith.mulf %16, %22 : vector<128x128xf32>
    %cst_19 = arith.constant dense<0.000000e+00> : vector<128xf32>
    %24 = vector.multi_reduction <add>, %23, %cst_19 [1] : vector<128x128xf32> to vector<128xf32>
    %25 = vector.shape_cast %24 : vector<128xf32> to vector<128x1xf32>
    %26 = vector.broadcast %20 : f32 to vector<128x1xf32>
    %27 = arith.addf %25, %26 : vector<128x1xf32>
    %28 = math.tanh %27 : vector<128x1xf32>
    %c0_20 = arith.constant 0 : index
    %c0_21 = arith.constant 0 : index
    %29 = vector.load %arg8[%c0_20, %c0_21] : memref<1x128xf32, #tpu.memory_space<vmem>>, vector<1x128xf32>
    %30 = vector.broadcast %28 : vector<128x1xf32> to vector<128x128xf32>
    %31 = vector.broadcast %29 : vector<1x128xf32> to vector<128x128xf32>
    %32 = arith.mulf %30, %31 : vector<128x128xf32>
    %c0_22 = arith.constant 0 : index
    %c0_23 = arith.constant 0 : index
    %33 = vector.load %arg9[%c0_22, %c0_23] : memref<1x128xf32, #tpu.memory_space<vmem>>, vector<1x128xf32>
    %34 = vector.broadcast %33 : vector<1x128xf32> to vector<128x128xf32>
    %35 = arith.addf %32, %34 : vector<128x128xf32>
    %36 = arith.mulf %35, %6 : vector<128x128xf32>
    %37 = arith.addf %5, %36 : vector<128x128xf32>
    %cst_24 = arith.constant -2.000000e+00 : f32
    %cst_25 = arith.constant 2.000000e+00 : f32
    %38 = vector.broadcast %cst_24 : f32 to vector<128x128xf32>
    %39 = arith.maximumf %38, %37 : vector<128x128xf32>
    %40 = vector.broadcast %cst_25 : f32 to vector<128x128xf32>
    %41 = arith.minimumf %40, %39 : vector<128x128xf32>
    %c0_26 = arith.constant 0 : index
    %c0_27 = arith.constant 0 : index
    %42 = vector.load %arg12[%c0_26, %c0_27] : memref<128x128xf32, #tpu.memory_space<vmem>>, vector<128x128xf32>
    tpu.vector_store %arg12[%c0_26, %c0_27], %41 {strides = array<i32>} : memref<128x128xf32, #tpu.memory_space<vmem>>, vector<128x128xf32>,
    %c0_28 = arith.constant 0 : index
    %43 = memref.load %arg10[%c0_28] : memref<2xf32, #tpu.memory_space<smem>>
    %cst_29 = arith.constant 1.000000e+00 : f32
    %44 = arith.subf %cst_29, %43 : f32
    %45 = vector.broadcast %44 : f32 to vector<128x128xf32>
    %46 = arith.mulf %45, %6 : vector<128x128xf32>
    %cst_30 = arith.constant dense<0.000000e+00> : vector<128x128xf32>
    %47 = tpu.matmul %4, %16, %cst_30 {dimension_numbers = #tpu.dot_dimension_numbers<[1], [0], [0], [1], [0, 0, 1, 1], [], []>} : vector<128x128xf32>, vector<128x128xf32>, vector<128x128xf32> -> vector<128x128xf32>
    %48 = vector.broadcast %43 : f32 to vector<128x128xf32>
    %49 = arith.mulf %48, %47 : vector<128x128xf32>
    %50 = arith.addf %46, %49 : vector<128x128xf32>
    %c0_31 = arith.constant 0 : index
    %c0_32 = arith.constant 0 : index
    %51 = vector.load %arg13[%c0_31, %c0_32] : memref<128x128xf32, #tpu.memory_space<vmem>>, vector<128x128xf32>
    tpu.vector_store %arg13[%c0_31, %c0_32], %50 {strides = array<i32>} : memref<128x128xf32, #tpu.memory_space<vmem>>, vector<128x128xf32>,
    return
  }
  func.func @transform_0(%arg0: i32) -> (i32, i32, i32) {
    %c0_i32 = arith.constant 0 : i32
    %c0_i32_0 = arith.constant 0 : i32
    %c0_i32_1 = arith.constant 0 : i32
    return %arg0, %c0_i32, %c0_i32_0 : i32, i32, i32
  }
  func.func @transform_1(%arg0: i32) -> (i32, i32) {
    %c0_i32 = arith.constant 0 : i32
    %c0_i32_0 = arith.constant 0 : i32
    %c0_i32_1 = arith.constant 0 : i32
    return %c0_i32, %c0_i32_0 : i32, i32
  }
  func.func @transform_2(%arg0: i32) -> (i32, i32) {
    %c0_i32 = arith.constant 0 : i32
    %c0_i32_0 = arith.constant 0 : i32
    %c0_i32_1 = arith.constant 0 : i32
    return %c0_i32, %c0_i32_0 : i32, i32
  }
  func.func @transform_3(%arg0: i32) -> (i32, i32) {
    %c0_i32 = arith.constant 0 : i32
    %c0_i32_0 = arith.constant 0 : i32
    %c0_i32_1 = arith.constant 0 : i32
    return %c0_i32, %c0_i32_0 : i32, i32
  }
  func.func @transform_4(%arg0: i32) -> (i32, i32) {
    %c0_i32 = arith.constant 0 : i32
    %c0_i32_0 = arith.constant 0 : i32
    %c0_i32_1 = arith.constant 0 : i32
    return %c0_i32, %c0_i32_0 : i32, i32
  }
  func.func @transform_5(%arg0: i32) -> (i32, i32) {
    %c0_i32 = arith.constant 0 : i32
    %c0_i32_0 = arith.constant 0 : i32
    %c0_i32_1 = arith.constant 0 : i32
    return %c0_i32, %c0_i32_0 : i32, i32
  }
  func.func @transform_6(%arg0: i32) -> (i32, i32) {
    %c0_i32 = arith.constant 0 : i32
    %c0_i32_0 = arith.constant 0 : i32
    %c0_i32_1 = arith.constant 0 : i32
    return %c0_i32, %c0_i32_0 : i32, i32
  }
  func.func @transform_7(%arg0: i32) -> (i32, i32) {
    %c0_i32 = arith.constant 0 : i32
    %c0_i32_0 = arith.constant 0 : i32
    %c0_i32_1 = arith.constant 0 : i32
    return %c0_i32, %c0_i32_0 : i32, i32
  }
  func.func @transform_8(%arg0: i32) -> (i32, i32) {
    %c0_i32 = arith.constant 0 : i32
    %c0_i32_0 = arith.constant 0 : i32
    %c0_i32_1 = arith.constant 0 : i32
    return %c0_i32, %c0_i32_0 : i32, i32
  }
  func.func @transform_9(%arg0: i32) -> i32 {
    %c0_i32 = arith.constant 0 : i32
    %c0_i32_0 = arith.constant 0 : i32
    return %c0_i32 : i32
  }
  func.func @transform_10(%arg0: i32) -> (i32, i32, i32) {
    %c0_i32 = arith.constant 0 : i32
    %c0_i32_0 = arith.constant 0 : i32
    %c0_i32_1 = arith.constant 0 : i32
    return %arg0, %c0_i32, %c0_i32_0 : i32, i32, i32
  }
  func.func @transform_11(%arg0: i32) -> (i32, i32) {
    %c0_i32 = arith.constant 0 : i32
    %c0_i32_0 = arith.constant 0 : i32
    %c0_i32_1 = arith.constant 0 : i32
    return %c0_i32, %c0_i32_0 : i32, i32
  }
  func.func @transform_12(%arg0: i32) -> (i32, i32) {
    %c0_i32 = arith.constant 0 : i32
    %c0_i32_0 = arith.constant 0 : i32
    %c0_i32_1 = arith.constant 0 : i32
    return %c0_i32, %c0_i32_0 : i32, i32
  }
}

</mosaic_0001>

<llo_original>
// kernel: eligibility_rollout.1
$region0: #{eligibility_rollout.1}
  #allocation0 [shape = 'u32[]', space=smem, size = 0x4, offset = 0x4, fixed_abs, tag = 'smem constant byte address 0x4 - core index']
  #allocation1 [shape = 'u32[144,128]{1,0:T(1,128)}', space=vmem, size = 0x12000, scoped, tag = 'internal scratch']
  %s0 = inlined_call_operand.vmem [shape: f32[4,128,128], index: 0, kind: input, shape index: {}]
  %s1 = inlined_call_operand.vmem [shape: f32[128,128], index: 1, kind: input, shape index: {}]
  %s2 = inlined_call_operand.vmem [shape: f32[1,128], index: 2, kind: input, shape index: {}]
  %s3 = inlined_call_operand.vmem [shape: f32[128,128], index: 3, kind: input, shape index: {}]
  %s4 = inlined_call_operand.vmem [shape: f32[128,128], index: 4, kind: input, shape index: {}, may-alias: {4,11}]
  %s5 = inlined_call_operand.vmem [shape: f32[128,128], index: 5, kind: input, shape index: {}, may-alias: {5,12}]
  %s6 = inlined_call_operand.vmem [shape: f32[1,128], index: 6, kind: input, shape index: {}]
  %s7 = inlined_call_operand.vmem [shape: f32[1,128], index: 7, kind: input, shape index: {}]
  %s8 = inlined_call_operand.vmem [shape: f32[1,128], index: 8, kind: input, shape index: {}]
  %s9 = inlined_call_operand.vmem [shape: f32[2], index: 9, kind: input, shape index: {}]
  %s10 = inlined_call_operand.vmem [shape: f32[4,128,128], index: 10, kind: output, shape index: {0}]
  %s11 = inlined_call_operand.vmem [shape: f32[128,128], index: 11, kind: output, shape index: {1}, may-alias: {4,11}]
  %s12 = inlined_call_operand.vmem [shape: f32[128,128], index: 12, kind: output, shape index: {2}, may-alias: {5,12}]
  %13 = xla_tuple %s10, %s11, %s12
  %s14 = sld [smem:[#allocation0]]
  $region97: #{eligibility_rollout.1} parent=0
    _
  %s16 = ssub.s32 1, %s14
  %s17 = scalar_select 0, %s16, %s14
  $region1: #{eligibility_rollout.1} parent=0
    #allocation2 [shape = 'u8[512]{0}', space=smem, size = 0x200, scoped, tag = 'input window, operand 9, single buffered']
    #allocation3 [shape = 's32[2]{0}', space=sflag, size = 0x8, scoped, tag = 'scoped memory for eligibility_rollout.1']
    %18 = vsyncpa [#allocation3], 0
    loop: start=0, step=1, limit=6
    $region2: #{eligibility_rollout.1} parent=1 // loop_pre_header
      _
    $region3: #{eligibility_rollout.1} parent=1 // loop_header
      %s20 = sphi 0, %s24
      %p21 = scmp.ge.s32.totalorder %s20, 6
      %s30 = sphi 0, %s32
      %s33 = sphi 0, %s30
      %s34 = sphi 0, %s33
      %s50 = sphi 0, %s34
      %s54 = sphi 0, %s54
      %s56 = sphi 0, %s54
      %s57 = sphi 0, %s56
      %s71 = sphi 0, %s57
      %s75 = sphi 0, %s75
      %s77 = sphi 0, %s75
      %s78 = sphi 0, %s77
      %s92 = sphi 0, %s78
      %s96 = sphi 0, %s96
      %s98 = sphi 0, %s96
      %s99 = sphi 0, %s98
      %s113 = sphi 0, %s99
      %s117 = sphi 0, %s117
      %s119 = sphi 0, %s117
      %s120 = sphi 0, %s119
      %s134 = sphi 0, %s120
      %s138 = sphi 0, %s138
      %s140 = sphi 0, %s138
      %s141 = sphi 0, %s140
      %s155 = sphi 0, %s141
      %s159 = sphi 0, %s159
      %s161 = sphi 0, %s159
      %s162 = sphi 0, %s161
      %s176 = sphi 0, %s162
      %s180 = sphi 0, %s180
      %s182 = sphi 0, %s180
      %s183 = sphi 0, %s182
      %s197 = sphi 0, %s183
      %s201 = sphi 0, %s201
      %s203 = sphi 0, %s201
      %s204 = sphi 0, %s203
      %s218 = sphi 0, %s204
      %s222 = sphi 0, %s222
      %s224 = sphi 0, %s222
      %s225 = sphi 0, %s224
      %s239 = sphi 0, %s225
      %s245 = sphi 0, %s247
      %s248 = sphi 0, %s245
      %s249 = sphi 0, %s248
      %s265 = sphi 0, %s249
      %s269 = sphi 0, %s269
      %s271 = sphi 0, %s269
      %s272 = sphi 0, %s271
      %s286 = sphi 0, %s272
      %s290 = sphi 0, %s290
      %s292 = sphi 0, %s290
      %s293 = sphi 0, %s292
      %s307 = sphi 0, %s293
    $region4: #{eligibility_rollout.1} parent=1 // loop_header_branch
      %23 = sbr.rel (%p21) target = $region8
    $region5: #{eligibility_rollout.1} parent=1 // loop_body
      %s25 = ssub.s32 %s20, 1
      %s26 = ssub.s32 %s20, 2
      %s27 = sadd.s32 %s20, 1
      %s28 = ssub.s32 %s20, %s27
      %p29 = scmp.eq.s32.totalorder %s28, 0
      %s31 = sadd.s32 %s30, 1
      %s32 = scalar_select %p29, %s30, %s31
      %p35 = pneg %p29
      %p36 = scmp.eq.s32.totalorder %s20, 3
      %p37 = por %p35, %p36
      %p38 = scmp.ne.s32.totalorder %s30, %s33
      %p39 = scmp.eq.s32.totalorder %s20, 0
      %p40 = por %p38, %p39
      %p41 = scmp.ne.s32.totalorder %s30, %s33
      %p42 = scmp.eq.s32.totalorder %s25, 3
      %p43 = por %p41, %p42
      %p44 = scmp.ne.s32.totalorder %s33, %s34
      %p45 = scmp.eq.s32.totalorder %s25, 0
      %p46 = por %p44, %p45
      %p47 = scmp.ne.s32.totalorder %s33, %s34
      %p48 = scmp.eq.s32.totalorder %s26, 3
      %p49 = por %p47, %p48
      %p51 = scmp.ne.s32.totalorder %s34, %s50
      %p52 = scmp.eq.s32.totalorder %s26, 0
      %p53 = por %p51, %p52
      %s55 = sadd.s32 %s54, 1
      %p58 = scmp.eq.s32.totalorder %s20, 3
      %p59 = scmp.ne.s32.totalorder %s54, %s56
      %p60 = scmp.eq.s32.totalorder %s20, 0
      %p61 = por %p59, %p60
      %p62 = scmp.ne.s32.totalorder %s54, %s56
      %p63 = scmp.eq.s32.totalorder %s25, 3
      %p64 = por %p62, %p63
      %p65 = scmp.ne.s32.totalorder %s56, %s57
      %p66 = scmp.eq.s32.totalorder %s25, 0
      %p67 = por %p65, %p66
      %p68 = scmp.ne.s32.totalorder %s56, %s57
      %p69 = scmp.eq.s32.totalorder %s26, 3
      %p70 = por %p68, %p69
      %p72 = scmp.ne.s32.totalorder %s57, %s71
      %p73 = scmp.eq.s32.totalorder %s26, 0
      %p74 = por %p72, %p73
      %s76 = sadd.s32 %s75, 1
      %p79 = scmp.eq.s32.totalorder %s20, 3
      %p80 = scmp.ne.s32.totalorder %s75, %s77
      %p81 = scmp.eq.s32.totalorder %s20, 0
      %p82 = por %p80, %p81
      %p83 = scmp.ne.s32.totalorder %s75, %s77
      %p84 = scmp.eq.s32.totalorder %s25, 3
      %p85 = por %p83, %p84
      %p86 = scmp.ne.s32.totalorder %s77, %s78
      %p87 = scmp.eq.s32.totalorder %s25, 0
      %p88 = por %p86, %p87
      %p89 = scmp.ne.s32.totalorder %s77, %s78
      %p90 = scmp.eq.s32.totalorder %s26, 3
      %p91 = por %p89, %p90
      %p93 = scmp.ne.s32.totalorder %s78, %s92
      %p94 = scmp.eq.s32.totalorder %s26, 0
      %p95 = por %p93, %p94
      %s97 = sadd.s32 %s96, 1
      %p100 = scmp.eq.s32.totalorder %s20, 3
      %p101 = scmp.ne.s32.totalorder %s96, %s98
      %p102 = scmp.eq.s32.totalorder %s20, 0
      %p103 = por %p101, %p102
      %p104 = scmp.ne.s32.totalorder %s96, %s98
      %p105 = scmp.eq.s32.totalorder %s25, 3
      %p106 = por %p104, %p105
      %p107 = scmp.ne.s32.totalorder %s98, %s99
      %p108 = scmp.eq.s32.totalorder %s25, 0
      %p109 = por %p107, %p108
      %p110 = scmp.ne.s32.totalorder %s98, %s99
      %p111 = scmp.eq.s32.totalorder %s26, 3
      %p112 = por %p110, %p111
      %p114 = scmp.ne.s32.totalorder %s99, %s113
      %p115 = scmp.eq.s32.totalorder %s26, 0
      %p116 = por %p114, %p115
      %s118 = sadd.s32 %s117, 1
      %p121 = scmp.eq.s32.totalorder %s20, 3
      %p122 = scmp.ne.s32.totalorder %s117, %s119
      %p123 = scmp.eq.s32.totalorder %s20, 0
      %p124 = por %p122, %p123
      %p125 = scmp.ne.s32.totalorder %s117, %s119
      %p126 = scmp.eq.s32.totalorder %s25, 3
      %p127 = por %p125, %p126
      %p128 = scmp.ne.s32.totalorder %s119, %s120
      %p129 = scmp.eq.s32.totalorder %s25, 0
      %p130 = por %p128, %p129
      %p131 = scmp.ne.s32.totalorder %s119, %s120
      %p132 = scmp.eq.s32.totalorder %s26, 3
      %p133 = por %p131, %p132
      %p135 = scmp.ne.s32.totalorder %s120, %s134
      %p136 = scmp.eq.s32.totalorder %s26, 0
      %p137 = por %p135, %p136
      %s139 = sadd.s32 %s138, 1
      %p142 = scmp.eq.s32.totalorder %s20, 3
      %p143 = scmp.ne.s32.totalorder %s138, %s140
      %p144 = scmp.eq.s32.totalorder %s20, 0
      %p145 = por %p143, %p144
      %p146 = scmp.ne.s32.totalorder %s138, %s140
      %p147 = scmp.eq.s32.totalorder %s25, 3
      %p148 = por %p146, %p147
      %p149 = scmp.ne.s32.totalorder %s140, %s141
      %p150 = scmp.eq.s32.totalorder %s25, 0
      %p151 = por %p149, %p150
      %p152 = scmp.ne.s32.totalorder %s140, %s141
      %p153 = scmp.eq.s32.totalorder %s26, 3
      %p154 = por %p152, %p153
      %p156 = scmp.ne.s32.totalorder %s141, %s155
      %p157 = scmp.eq.s32.totalorder %s26, 0
      %p158 = por %p156, %p157
      %s160 = sadd.s32 %s159, 1
      %p163 = scmp.eq.s32.totalorder %s20, 3
      %p164 = scmp.ne.s32.totalorder %s159, %s161
      %p165 = scmp.eq.s32.totalorder %s20, 0
      %p166 = por %p164, %p165
      %p167 = scmp.ne.s32.totalorder %s159, %s161
      %p168 = scmp.eq.s32.totalorder %s25, 3
      %p169 = por %p167, %p168
      %p170 = scmp.ne.s32.totalorder %s161, %s162
      %p171 = scmp.eq.s32.totalorder %s25, 0
      %p172 = por %p170, %p171
      %p173 = scmp.ne.s32.totalorder %s161, %s162
      %p174 = scmp.eq.s32.totalorder %s26, 3
      %p175 = por %p173, %p174
      %p177 = scmp.ne.s32.totalorder %s162, %s176
      %p178 = scmp.eq.s32.totalorder %s26, 0
      %p179 = por %p177, %p178
      %s181 = sadd.s32 %s180, 1
      %p184 = scmp.eq.s32.totalorder %s20, 3
      %p185 = scmp.ne.s32.totalorder %s180, %s182
      %p186 = scmp.eq.s32.totalorder %s20, 0
      %p187 = por %p185, %p186
      %p188 = scmp.ne.s32.totalorder %s180, %s182
      %p189 = scmp.eq.s32.totalorder %s25, 3
      %p190 = por %p188, %p189
      %p191 = scmp.ne.s32.totalorder %s182, %s183
      %p192 = scmp.eq.s32.totalorder %s25, 0
      %p193 = por %p191, %p192
      %p194 = scmp.ne.s32.totalorder %s182, %s183
      %p195 = scmp.eq.s32.totalorder %s26, 3
      %p196 = por %p194, %p195
      %p198 = scmp.ne.s32.totalorder %s183, %s197
      %p199 = scmp.eq.s32.totalorder %s26, 0
      %p200 = por %p198, %p199
      %s202 = sadd.s32 %s201, 1
      %p205 = scmp.eq.s32.totalorder %s20, 3
      %p206 = scmp.ne.s32.totalorder %s201, %s203
      %p207 = scmp.eq.s32.totalorder %s20, 0
      %p208 = por %p206, %p207
      %p209 = scmp.ne.s32.totalorder %s201, %s203
      %p210 = scmp.eq.s32.totalorder %s25, 3
      %p211 = por %p209, %p210
      %p212 = scmp.ne.s32.totalorder %s203, %s204
      %p213 = scmp.eq.s32.totalorder %s25, 0
      %p214 = por %p212, %p213
      %p215 = scmp.ne.s32.totalorder %s203, %s204
      %p216 = scmp.eq.s32.totalorder %s26, 3
      %p217 = por %p215, %p216
      %p219 = scmp.ne.s32.totalorder %s204, %s218
      %p220 = scmp.eq.s32.totalorder %s26, 0
      %p221 = por %p219, %p220
      %s223 = sadd.s32 %s222, 1
      %p226 = scmp.eq.s32.totalorder %s20, 3
      %p227 = scmp.ne.s32.totalorder %s222, %s224
      %p228 = scmp.eq.s32.totalorder %s20, 0
      %p229 = por %p227, %p228
      %p230 = scmp.ne.s32.totalorder %s222, %s224
      %p231 = scmp.eq.s32.totalorder %s25, 3
      %p232 = por %p230, %p231
      %p233 = scmp.ne.s32.totalorder %s224, %s225
      %p234 = scmp.eq.s32.totalorder %s25, 0
      %p235 = por %p233, %p234
      %p236 = scmp.ne.s32.totalorder %s224, %s225
      %p237 = scmp.eq.s32.totalorder %s26, 3
      %p238 = por %p236, %p237
      %p240 = scmp.ne.s32.totalorder %s225, %s239
      %p241 = scmp.eq.s32.totalorder %s26, 0
      %p242 = por %p240, %p241
      %s243 = ssub.s32 %s20, %s27
      %p244 = scmp.eq.s32.totalorder %s243, 0
      %s246 = sadd.s32 %s245, 1
      %s247 = scalar_select %p244, %s245, %s246
      %p250 = pneg %p244
      %p251 = scmp.eq.s32.totalorder %s20, 3
      %p252 = por %p250, %p251
      %p253 = scmp.ne.s32.totalorder %s245, %s248
      %p254 = scmp.eq.s32.totalorder %s20, 0
      %p255 = por %p253, %p254
      %p256 = scmp.ne.s32.totalorder %s245, %s248
      %p257 = scmp.eq.s32.totalorder %s25, 3
      %p258 = por %p256, %p257
      %p259 = scmp.ne.s32.totalorder %s248, %s249
      %p260 = scmp.eq.s32.totalorder %s25, 0
      %p261 = por %p259, %p260
      %p262 = scmp.ne.s32.totalorder %s248, %s249
      %p263 = scmp.eq.s32.totalorder %s26, 3
      %p264 = por %p262, %p263
      %p266 = scmp.ne.s32.totalorder %s249, %s265
      %p267 = scmp.eq.s32.totalorder %s26, 0
      %p268 = por %p266, %p267
      %s270 = sadd.s32 %s269, 1
      %p273 = scmp.eq.s32.totalorder %s20, 3
      %p274 = scmp.ne.s32.totalorder %s269, %s271
      %p275 = scmp.eq.s32.totalorder %s20, 0
      %p276 = por %p274, %p275
      %p277 = scmp.ne.s32.totalorder %s269, %s271
      %p278 = scmp.eq.s32.totalorder %s25, 3
      %p279 = por %p277, %p278
      %p280 = scmp.ne.s32.totalorder %s271, %s272
      %p281 = scmp.eq.s32.totalorder %s25, 0
      %p282 = por %p280, %p281
      %p283 = scmp.ne.s32.totalorder %s271, %s272
      %p284 = scmp.eq.s32.totalorder %s26, 3
      %p285 = por %p283, %p284
      %p287 = scmp.ne.s32.totalorder %s272, %s286
      %p288 = scmp.eq.s32.totalorder %s26, 0
      %p289 = por %p287, %p288
      %s291 = sadd.s32 %s290, 1
      %p294 = scmp.eq.s32.totalorder %s20, 3
      %p295 = scmp.ne.s32.totalorder %s290, %s292
      %p296 = scmp.eq.s32.totalorder %s20, 0
      %p297 = por %p295, %p296
      %p298 = scmp.ne.s32.totalorder %s290, %s292
      %p299 = scmp.eq.s32.totalorder %s25, 3
      %p300 = por %p298, %p299
      %p301 = scmp.ne.s32.totalorder %s292, %s293
      %p302 = scmp.eq.s32.totalorder %s25, 0
      %p303 = por %p301, %p302
      %p304 = scmp.ne.s32.totalorder %s292, %s293
      %p305 = scmp.eq.s32.totalorder %s26, 3
      %p306 = por %p304, %p305
      %p308 = scmp.ne.s32.totalorder %s293, %s307
      %p309 = scmp.eq.s32.totalorder %s26, 0
      %p310 = por %p308, %p309
      %p311 = scmp.le.s32.totalorder 1, %s20
      %p312 = scmp.lt.s32.totalorder %s20, 5
      %p313 = pnand %p311, %p312
      %p314 = pneg %p313
      // Predicated region
      $region9: #{eligibility_rollout.1} parent=5 // pred_check
        _
      $region10: #{eligibility_rollout.1} parent=5 // pred_check_branch
        %316 = sbr.rel (%p313) target = $region12
      $region11: #{eligibility_rollout.1} parent=5 // pred_region
        %s317 = ssub.s32 %s20, 1
        // Predicated region
        $region13: #{eligibility_rollout.1} parent=11 // pred_check
          %p318 = pneg %p67
        $region14: #{eligibility_rollout.1} parent=11 // pred_check_branch
          %320 = sbr.rel (%p318) target = $region16
        $region15: #{eligibility_rollout.1} parent=11 // pred_region
          _
        $region16: #{eligibility_rollout.1} parent=11 // pred_fallthru
          _
        // Predicated region
        $region17: #{eligibility_rollout.1} parent=11 // pred_check
          %p321 = pneg %p88
        $region18: #{eligibility_rollout.1} parent=11 // pred_check_branch
          %323 = sbr.rel (%p321) target = $region20
        $region19: #{eligibility_rollout.1} parent=11 // pred_region
          _
        $region20: #{eligibility_rollout.1} parent=11 // pred_fallthru
          _
        // Predicated region
        $region21: #{eligibility_rollout.1} parent=11 // pred_check
          %p324 = pneg %p109
        $region22: #{eligibility_rollout.1} parent=11 // pred_check_branch
          %326 = sbr.rel (%p324) target = $region24
        $region23: #{eligibility_rollout.1} parent=11 // pred_region
          _
        $region24: #{eligibility_rollout.1} parent=11 // pred_fallthru
          _
        // Predicated region
        $region25: #{eligibility_rollout.1} parent=11 // pred_check
          %p327 = pneg %p130
        $region26: #{eligibility_rollout.1} parent=11 // pred_check_branch
          %329 = sbr.rel (%p327) target = $region28
        $region27: #{eligibility_rollout.1} parent=11 // pred_region
          _
        $region28: #{eligibility_rollout.1} parent=11 // pred_fallthru
          _
        // Predicated region
        $region29: #{eligibility_rollout.1} parent=11 // pred_check
          %p330 = pneg %p151
        $region30: #{eligibility_rollout.1} parent=11 // pred_check_branch
          %332 = sbr.rel (%p330) target = $region32
        $region31: #{eligibility_rollout.1} parent=11 // pred_region
          _
        $region32: #{eligibility_rollout.1} parent=11 // pred_fallthru
          _
        // Predicated region
        $region33: #{eligibility_rollout.1} parent=11 // pred_check
          %p333 = pneg %p172
        $region34: #{eligibility_rollout.1} parent=11 // pred_check_branch
          %335 = sbr.rel (%p333) target = $region36
        $region35: #{eligibility_rollout.1} parent=11 // pred_region
          _
        $region36: #{eligibility_rollout.1} parent=11 // pred_fallthru
          _
        // Predicated region
        $region37: #{eligibility_rollout.1} parent=11 // pred_check
          %p336 = pneg %p193
        $region38: #{eligibility_rollout.1} parent=11 // pred_check_branch
          %338 = sbr.rel (%p336) target = $region40
        $region39: #{eligibility_rollout.1} parent=11 // pred_region
          _
        $region40: #{eligibility_rollout.1} parent=11 // pred_fallthru
          _
        // Predicated region
        $region41: #{eligibility_rollout.1} parent=11 // pred_check
          %p339 = pneg %p214
        $region42: #{eligibility_rollout.1} parent=11 // pred_check_branch
          %341 = sbr.rel (%p339) target = $region44
        $region43: #{eligibility_rollout.1} parent=11 // pred_region
          _
        $region44: #{eligibility_rollout.1} parent=11 // pred_fallthru
          _
        // Predicated region
        $region45: #{eligibility_rollout.1} parent=11 // pred_check
          %p342 = pneg %p235
        $region46: #{eligibility_rollout.1} parent=11 // pred_check_branch
          %344 = sbr.rel (%p342) target = $region48
        $region47: #{eligibility_rollout.1} parent=11 // pred_region
          %s346 = ssub.s32 16, 16
          %347 = vsyncadd [#allocation3], %s346
          %s349 = sshll.u32 %s9, 4
          %s350 = int_to_ptr.vmem [resolvable:$true] %s349
          %352 = dma.vmem_to_smem %s350, 16, [#allocation2], [#allocation3]
        $region48: #{eligibility_rollout.1} parent=11 // pred_fallthru
          _
      $region12: #{eligibility_rollout.1} parent=5 // pred_fallthru
        _
      %p353 = scmp.lt.s32.totalorder %s20, 4
      // Predicated region
      $region49: #{eligibility_rollout.1} parent=5 // pred_check
        %p354 = pneg %p353
      $region50: #{eligibility_rollout.1} parent=5 // pred_check_branch
        %356 = sbr.rel (%p354) target = $region52
      $region51: #{eligibility_rollout.1} parent=5 // pred_region
        // Predicated region
        $region53: #{eligibility_rollout.1} parent=51 // pred_check
          %p357 = pneg %p40
        $region54: #{eligibility_rollout.1} parent=51 // pred_check_branch
          %359 = sbr.rel (%p357) target = $region56
        $region55: #{eligibility_rollout.1} parent=51 // pred_region
          %p360 = scmp.lt.s32.totalorder %s20, 3
          %s361 = scalar_select %p360, %s20, 3
          %s362 = smul.addr %s361, 16
          %s363 = smul.addr %s362, 8
          %s364 = scalar_lea.vmem %s0, %s363
        $region56: #{eligibility_rollout.1} parent=51 // pred_fallthru
          _
      $region52: #{eligibility_rollout.1} parent=5 // pred_fallthru
        _
      %p365 = scmp.le.s32.totalorder 1, %s20
      %p366 = scmp.lt.s32.totalorder %s20, 5
      %p367 = pnand %p365, %p366
      %p368 = pneg %p367
      // Predicated region
      $region57: #{eligibility_rollout.1} parent=5 // pred_check
        _
      $region58: #{eligibility_rollout.1} parent=5 // pred_check_branch
        %370 = sbr.rel (%p367) target = $region60
      $region59: #{eligibility_rollout.1} parent=5 // pred_region
        %s371 = ssub.s32 %s20, 1
        // Predicated region
        $region61: #{eligibility_rollout.1} parent=59 // pred_check
          %p372 = pneg %p235
        $region62: #{eligibility_rollout.1} parent=59 // pred_check_branch
          %374 = sbr.rel (%p372) target = $region64
        $region63: #{eligibility_rollout.1} parent=59 // pred_region
          %375 = dma.done [#allocation3], 16
        $region64: #{eligibility_rollout.1} parent=59 // pred_fallthru
          _
        %376 = sfence
        %p377 = scmp.lt.s32.totalorder %s25, 3
        %s378 = scalar_select %p377, %s25, 3
        %s379 = smul.addr %s378, 16
        %s380 = smul.addr %s379, 8
        %s381 = scalar_lea.vmem %s0, %s380
        %p382 = pneg %p46
        %p383 = pneg %p43
        %p384 = pneg %p67
        %p385 = pneg %p64
        %p386 = pneg %p88
        %p387 = pneg %p85
        %p388 = pneg %p109
        %p389 = pneg %p106
        %p390 = pneg %p130
        %p391 = pneg %p127
        %p392 = pneg %p151
        %p393 = pneg %p148
        %p394 = pneg %p172
        %p395 = pneg %p169
        %p396 = pneg %p193
        %p397 = pneg %p190
        %p398 = pneg %p214
        %p399 = pneg %p211
        %p400 = pneg %p235
        %p401 = pneg %p232
        %p402 = pneg %p261
        %p403 = pneg %p258
        %p404 = scmp.lt.s32.totalorder %s25, 3
        %s405 = scalar_select %p404, %s25, 3
        %s406 = smul.addr %s405, 16
        %s407 = smul.addr %s406, 8
        %s408 = scalar_lea.vmem %s10, %s407
        %p409 = pneg %p282
        %p410 = pneg %p279
        %p411 = pneg %p303
        %p412 = pneg %p300
        %p413 = scmp.lt.s32.totalorder %s25, 3
        %s414 = scalar_select %p413, %s25, 3
        %s415 = smul.addr %s414, 16
        %s416 = smul.addr %s415, 8
        %s417 = scalar_lea.vmem %s0, %s416
        %p418 = scmp.lt.s32.totalorder %s25, 3
        %s419 = scalar_select %p418, %s25, 3
        %s420 = smul.addr %s419, 16
        %s421 = smul.addr %s420, 8
        %s422 = scalar_lea.vmem %s10, %s421
        %p423 = scmp.eq.s32.totalorder %s25, 0
        // Predicated region
        $region65: #{eligibility_rollout.1} parent=59 // pred_check
          %p424 = pneg %p423
        $region66: #{eligibility_rollout.1} parent=59 // pred_check_branch
          %426 = sbr.rel (%p424) target = $region68
        $region67: #{eligibility_rollout.1} parent=59 // pred_region
          %v427 = vld [vmem:[%s4] sm:$0xff]
          %v428 = vld [vmem:[%s4 + $0x8] sm:$0xff]
          %v429 = vld [vmem:[%s4 + $0x10] sm:$0xff]
          %v430 = vld [vmem:[%s4 + $0x18] sm:$0xff]
          %v431 = vld [vmem:[%s4 + $0x20] sm:$0xff]
          %v432 = vld [vmem:[%s4 + $0x28] sm:$0xff]
          %v433 = vld [vmem:[%s4 + $0x30] sm:$0xff]
          %v434 = vld [vmem:[%s4 + $0x38] sm:$0xff]
          %v435 = vld [vmem:[%s4 + $0x40] sm:$0xff]
          %v436 = vld [vmem:[%s4 + $0x48] sm:$0xff]
          %v437 = vld [vmem:[%s4 + $0x50] sm:$0xff]
          %v438 = vld [vmem:[%s4 + $0x58] sm:$0xff]
          %v439 = vld [vmem:[%s4 + $0x60] sm:$0xff]
          %v440 = vld [vmem:[%s4 + $0x68] sm:$0xff]
          %v441 = vld [vmem:[%s4 + $0x70] sm:$0xff]
          %v442 = vld [vmem:[%s4 + $0x78] sm:$0xff]
          %443 = vst [vmem:[%s11] sm:$0xff] %v427
          %444 = vst [vmem:[%s11 + $0x8] sm:$0xff] %v428
          %445 = vst [vmem:[%s11 + $0x10] sm:$0xff] %v429
          %446 = vst [vmem:[%s11 + $0x18] sm:$0xff] %v430
          %447 = vst [vmem:[%s11 + $0x20] sm:$0xff] %v431
          %448 = vst [vmem:[%s11 + $0x28] sm:$0xff] %v432
          %449 = vst [vmem:[%s11 + $0x30] sm:$0xff] %v433
          %450 = vst [vmem:[%s11 + $0x38] sm:$0xff] %v434
          %451 = vst [vmem:[%s11 + $0x40] sm:$0xff] %v435
          %452 = vst [vmem:[%s11 + $0x48] sm:$0xff] %v436
          %453 = vst [vmem:[%s11 + $0x50] sm:$0xff] %v437
          %454 = vst [vmem:[%s11 + $0x58] sm:$0xff] %v438
          %455 = vst [vmem:[%s11 + $0x60] sm:$0xff] %v439
          %456 = vst [vmem:[%s11 + $0x68] sm:$0xff] %v440
          %457 = vst [vmem:[%s11 + $0x70] sm:$0xff] %v441
          %458 = vst [vmem:[%s11 + $0x78] sm:$0xff] %v442
          %v459 = vld [vmem:[%s5] sm:$0xff]
          %v460 = vld [vmem:[%s5 + $0x8] sm:$0xff]
          %v461 = vld [vmem:[%s5 + $0x10] sm:$0xff]
          %v462 = vld [vmem:[%s5 + $0x18] sm:$0xff]
          %v463 = vld [vmem:[%s5 + $0x20] sm:$0xff]
          %v464 = vld [vmem:[%s5 + $0x28] sm:$0xff]
          %v465 = vld [vmem:[%s5 + $0x30] sm:$0xff]
          %v466 = vld [vmem:[%s5 + $0x38] sm:$0xff]
          %v467 = vld [vmem:[%s5 + $0x40] sm:$0xff]
          %v468 = vld [vmem:[%s5 + $0x48] sm:$0xff]
          %v469 = vld [vmem:[%s5 + $0x50] sm:$0xff]
          %v470 = vld [vmem:[%s5 + $0x58] sm:$0xff]
          %v471 = vld [vmem:[%s5 + $0x60] sm:$0xff]
          %v472 = vld [vmem:[%s5 + $0x68] sm:$0xff]
          %v473 = vld [vmem:[%s5 + $0x70] sm:$0xff]
          %v474 = vld [vmem:[%s5 + $0x78] sm:$0xff]
          %475 = vst [vmem:[%s12] sm:$0xff] %v459
          %476 = vst [vmem:[%s12 + $0x8] sm:$0xff] %v460
          %477 = vst [vmem:[%s12 + $0x10] sm:$0xff] %v461
          %478 = vst [vmem:[%s12 + $0x18] sm:$0xff] %v462
          %479 = vst [vmem:[%s12 + $0x20] sm:$0xff] %v463
          %480 = vst [vmem:[%s12 + $0x28] sm:$0xff] %v464
          %481 = vst [vmem:[%s12 + $0x30] sm:$0xff] %v465
          %482 = vst [vmem:[%s12 + $0x38] sm:$0xff] %v466
          %483 = vst [vmem:[%s12 + $0x40] sm:$0xff] %v467
          %484 = vst [vmem:[%s12 + $0x48] sm:$0xff] %v468
          %485 = vst [vmem:[%s12 + $0x50] sm:$0xff] %v469
          %486 = vst [vmem:[%s12 + $0x58] sm:$0xff] %v470
          %487 = vst [vmem:[%s12 + $0x60] sm:$0xff] %v471
          %488 = vst [vmem:[%s12 + $0x68] sm:$0xff] %v472
          %489 = vst [vmem:[%s12 + $0x70] sm:$0xff] %v473
          %490 = vst [vmem:[%s12 + $0x78] sm:$0xff] %v474
        $region68: #{eligibility_rollout.1} parent=59 // pred_fallthru
          _
        %v491 = vld [vmem:[%s417] sm:$0xff]
        %v492 = vld [vmem:[%s417 + $0x8] sm:$0xff]
        %v493 = vld [vmem:[%s417 + $0x10] sm:$0xff]
        %v494 = vld [vmem:[%s417 + $0x18] sm:$0xff]
        %v495 = vld [vmem:[%s417 + $0x20] sm:$0xff]
        %v496 = vld [vmem:[%s417 + $0x28] sm:$0xff]
        %v497 = vld [vmem:[%s417 + $0x30] sm:$0xff]
        %v498 = vld [vmem:[%s417 + $0x38] sm:$0xff]
        %v499 = vld [vmem:[%s417 + $0x40] sm:$0xff]
        %v500 = vld [vmem:[%s417 + $0x48] sm:$0xff]
        %v501 = vld [vmem:[%s417 + $0x50] sm:$0xff]
        %v502 = vld [vmem:[%s417 + $0x58] sm:$0xff]
        %v503 = vld [vmem:[%s417 + $0x60] sm:$0xff]
        %v504 = vld [vmem:[%s417 + $0x68] sm:$0xff]
        %v505 = vld [vmem:[%s417 + $0x70] sm:$0xff]
        %v506 = vld [vmem:[%s417 + $0x78] sm:$0xff]
        %v507 = vld [vmem:[%s11] sm:$0xff]
        %v508 = vld [vmem:[%s11 + $0x8] sm:$0xff]
        %v509 = vld [vmem:[%s11 + $0x10] sm:$0xff]
        %v510 = vld [vmem:[%s11 + $0x18] sm:$0xff]
        %v511 = vld [vmem:[%s11 + $0x20] sm:$0xff]
        %v512 = vld [vmem:[%s11 + $0x28] sm:$0xff]
        %v513 = vld [vmem:[%s11 + $0x30] sm:$0xff]
        %v514 = vld [vmem:[%s11 + $0x38] sm:$0xff]
        %v515 = vld [vmem:[%s11 + $0x40] sm:$0xff]
        %v516 = vld [vmem:[%s11 + $0x48] sm:$0xff]
        %v517 = vld [vmem:[%s11 + $0x50] sm:$0xff]
        %v518 = vld [vmem:[%s11 + $0x58] sm:$0xff]
        %v519 = vld [vmem:[%s11 + $0x60] sm:$0xff]
        %v520 = vld [vmem:[%s11 + $0x68] sm:$0xff]
        %v521 = vld [vmem:[%s11 + $0x70] sm:$0xff]
        %v522 = vld [vmem:[%s11 + $0x78] sm:$0xff]
        %v523 = vld [vmem:[%s12] sm:$0xff]
        %v524 = vld [vmem:[%s12 + $0x8] sm:$0xff]
        %v525 = vld [vmem:[%s12 + $0x10] sm:$0xff]
        %v526 = vld [vmem:[%s12 + $0x18] sm:$0xff]
        %v527 = vld [vmem:[%s12 + $0x20] sm:$0xff]
        %v528 = vld [vmem:[%s12 + $0x28] sm:$0xff]
        %v529 = vld [vmem:[%s12 + $0x30] sm:$0xff]
        %v530 = vld [vmem:[%s12 + $0x38] sm:$0xff]
        %v531 = vld [vmem:[%s12 + $0x40] sm:$0xff]
        %v532 = vld [vmem:[%s12 + $0x48] sm:$0xff]
        %v533 = vld [vmem:[%s12 + $0x50] sm:$0xff]
        %v534 = vld [vmem:[%s12 + $0x58] sm:$0xff]
        %v535 = vld [vmem:[%s12 + $0x60] sm:$0xff]
        %v536 = vld [vmem:[%s12 + $0x68] sm:$0xff]
        %v537 = vld [vmem:[%s12 + $0x70] sm:$0xff]
        %v538 = vld [vmem:[%s12 + $0x78] sm:$0xff]
        %v539 = vld [vmem:[%s1] sm:$0xff]
        %v540 = vld [vmem:[%s1 + $0x8] sm:$0xff]
        %v541 = vld [vmem:[%s1 + $0x10] sm:$0xff]
        %v542 = vld [vmem:[%s1 + $0x18] sm:$0xff]
        %v543 = vld [vmem:[%s1 + $0x20] sm:$0xff]
        %v544 = vld [vmem:[%s1 + $0x28] sm:$0xff]
        %v545 = vld [vmem:[%s1 + $0x30] sm:$0xff]
        %v546 = vld [vmem:[%s1 + $0x38] sm:$0xff]
        %v547 = vld [vmem:[%s1 + $0x40] sm:$0xff]
        %v548 = vld [vmem:[%s1 + $0x48] sm:$0xff]
        %v549 = vld [vmem:[%s1 + $0x50] sm:$0xff]
        %v550 = vld [vmem:[%s1 + $0x58] sm:$0xff]
        %v551 = vld [vmem:[%s1 + $0x60] sm:$0xff]
        %v552 = vld [vmem:[%s1 + $0x68] sm:$0xff]
        %v553 = vld [vmem:[%s1 + $0x70] sm:$0xff]
        %v554 = vld [vmem:[%s1 + $0x78] sm:$0xff]
        %v555 = vld [vmem:[%s2] sm:$0x1]
        %v557 = vlaneseq
        %v558 = vshrl.u32 %v557, 7
        %v559 = vsub.s32 0, %v558
        %v560 = vrot.slane %v555, %v559
        %562 = vmatprep.subr.mxu0 0.0
        %563 = vmatpush1.msra.mxu0 %v539
        %564 = vmatprep.subr.mxu0 0.0
        %565 = vmatpush1.msra.mxu0 %v540
        %566 = vmatprep.subr.mxu0 0.0
        %567 = vmatpush1.msra.mxu0 %v541
        %568 = vmatprep.subr.mxu0 0.0
        %569 = vmatpush1.msra.mxu0 %v542
        %570 = vmatprep.subr.mxu0 0.0
        %571 = vmatpush1.msra.mxu0 %v543
        %572 = vmatprep.subr.mxu0 0.0
        %573 = vmatpush1.msra.mxu0 %v544
        %574 = vmatprep.subr.mxu0 0.0
        %575 = vmatpush1.msra.mxu0 %v545
        %576 = vmatprep.subr.mxu0 0.0
        %577 = vmatpush1.msra.mxu0 %v546
        %578 = vmatprep.subr.mxu0 0.0
        %579 = vmatpush1.msra.mxu0 %v547
        %580 = vmatprep.subr.mxu0 0.0
        %581 = vmatpush1.msra.mxu0 %v548
        %582 = vmatprep.subr.mxu0 0.0
        %583 = vmatpush1.msra.mxu0 %v549
        %584 = vmatprep.subr.mxu0 0.0
        %585 = vmatpush1.msra.mxu0 %v550
        %586 = vmatprep.subr.mxu0 0.0
        %587 = vmatpush1.msra.mxu0 %v551
        %588 = vmatprep.subr.mxu0 0.0
        %589 = vmatpush1.msra.mxu0 %v552
        %590 = vmatprep.subr.mxu0 0.0
        %591 = vmatpush1.msra.mxu0 %v553
        %592 = vmatprep.subr.mxu0 0.0
        %593 = vmatpush1.msra.mxu0 %v554
        %594 = vmatprep.subr.mxu0 0.0
        %595 = vmatpush1.msra.mxu0 0.0
        %596 = vmatprep.subr.mxu0 0.0
        %597 = vmatpush1.msra.mxu0 0.0
        %598 = vmatprep.subr.mxu0 0.0
        %599 = vmatpush1.msra.mxu0 0.0
        %600 = vmatprep.subr.mxu0 0.0
        %601 = vmatpush1.msra.mxu0 0.0
        %602 = vmatprep.subr.mxu0 0.0
        %603 = vmatpush1.msra.mxu0 0.0
        %604 = vmatprep.subr.mxu0 0.0
        %605 = vmatpush1.msra.mxu0 0.0
        %606 = vmatprep.subr.mxu0 0.0
        %607 = vmatpush1.msra.mxu0 0.0
        %608 = vmatprep.subr.mxu0 0.0
        %609 = vmatpush1.msra.mxu0 0.0
        %610 = vmatprep.subr.mxu0 0.0
        %611 = vmatpush1.msra.mxu0 0.0
        %612 = vmatprep.subr.mxu0 0.0
        %613 = vmatpush1.msra.mxu0 0.0
        %614 = vmatprep.subr.mxu0 0.0
        %615 = vmatpush1.msra.mxu0 0.0
        %616 = vmatprep.subr.mxu0 0.0
        %617 = vmatpush1.msra.mxu0 0.0
        %618 = vmatprep.subr.mxu0 0.0
        %619 = vmatpush1.msra.mxu0 0.0
        %620 = vmatprep.subr.mxu0 0.0
        %621 = vmatpush1.msra.mxu0 0.0
        %622 = vmatprep.subr.mxu0 0.0
        %623 = vmatpush1.msra.mxu0 0.0
        %624 = vmatprep.subr.mxu0 0.0
        %625 = vmatpush1.msra.mxu0 0.0
        %626 = vmatprep.mubr.f32.mxu0 0.0
        %627 = vmatmul.mubr.f32.gmra.mrb[0].mxu0 %v491
        %v628 = vpop.f32.mrb[0].mxu0
        %v629 = vadd.f32 %v560, %v628
        %v630 = vpop.f32.mrb[0].mxu0
        %631 = vmatprep.mubr.f32.mxu0 0.0
        %632 = vmatmul.mubr.f32.gmra.mrb[0].mxu0 %v492
        %v633 = vpop.f32.mrb[0].mxu0
        %v634 = vadd.f32 %v560, %v633
        %v635 = vpop.f32.mrb[0].mxu0
        %636 = vmatprep.mubr.f32.mxu0 0.0
        %637 = vmatmul.mubr.f32.gmra.mrb[0].mxu0 %v493
        %v638 = vpop.f32.mrb[0].mxu0
        %v639 = vadd.f32 %v560, %v638
        %v640 = vpop.f32.mrb[0].mxu0
        %641 = vmatprep.mubr.f32.mxu0 0.0
        %642 = vmatmul.mubr.f32.gmra.mrb[0].mxu0 %v494
        %v643 = vpop.f32.mrb[0].mxu0
        %v644 = vadd.f32 %v560, %v643
        %v645 = vpop.f32.mrb[0].mxu0
        %646 = vmatprep.mubr.f32.mxu0 0.0
        %647 = vmatmul.mubr.f32.gmra.mrb[0].mxu0 %v495
        %v648 = vpop.f32.mrb[0].mxu0
        %v649 = vadd.f32 %v560, %v648
        %v650 = vpop.f32.mrb[0].mxu0
        %651 = vmatprep.mubr.f32.mxu0 0.0
        %652 = vmatmul.mubr.f32.gmra.mrb[0].mxu0 %v496
        %v653 = vpop.f32.mrb[0].mxu0
        %v654 = vadd.f32 %v560, %v653
        %v655 = vpop.f32.mrb[0].mxu0
        %656 = vmatprep.mubr.f32.mxu0 0.0
        %657 = vmatmul.mubr.f32.gmra.mrb[0].mxu0 %v497
        %v658 = vpop.f32.mrb[0].mxu0
        %v659 = vadd.f32 %v560, %v658
        %v660 = vpop.f32.mrb[0].mxu0
        %661 = vmatprep.mubr.f32.mxu0 0.0
        %662 = vmatmul.mubr.f32.gmra.mrb[0].mxu0 %v498
        %v663 = vpop.f32.mrb[0].mxu0
        %v664 = vadd.f32 %v560, %v663
        %v665 = vpop.f32.mrb[0].mxu0
        %666 = vmatprep.mubr.f32.mxu0 0.0
        %667 = vmatmul.mubr.f32.gmra.mrb[0].mxu0 %v499
        %v668 = vpop.f32.mrb[0].mxu0
        %v669 = vadd.f32 %v560, %v668
        %v670 = vpop.f32.mrb[0].mxu0
        %671 = vmatprep.mubr.f32.mxu0 0.0
        %672 = vmatmul.mubr.f32.gmra.mrb[0].mxu0 %v500
        %v673 = vpop.f32.mrb[0].mxu0
        %v674 = vadd.f32 %v560, %v673
        %v675 = vpop.f32.mrb[0].mxu0
        %676 = vmatprep.mubr.f32.mxu0 0.0
        %677 = vmatmul.mubr.f32.gmra.mrb[0].mxu0 %v501
        %v678 = vpop.f32.mrb[0].mxu0
        %v679 = vadd.f32 %v560, %v678
        %v680 = vpop.f32.mrb[0].mxu0
        %681 = vmatprep.mubr.f32.mxu0 0.0
        %682 = vmatmul.mubr.f32.gmra.mrb[0].mxu0 %v502
        %v683 = vpop.f32.mrb[0].mxu0
        %v684 = vadd.f32 %v560, %v683
        %v685 = vpop.f32.mrb[0].mxu0
        %686 = vmatprep.mubr.f32.mxu0 0.0
        %687 = vmatmul.mubr.f32.gmra.mrb[0].mxu0 %v503
        %v688 = vpop.f32.mrb[0].mxu0
        %v689 = vadd.f32 %v560, %v688
        %v690 = vpop.f32.mrb[0].mxu0
        %691 = vmatprep.mubr.f32.mxu0 0.0
        %692 = vmatmul.mubr.f32.gmra.mrb[0].mxu0 %v504
        %v693 = vpop.f32.mrb[0].mxu0
        %v694 = vadd.f32 %v560, %v693
        %v695 = vpop.f32.mrb[0].mxu0
        %696 = vmatprep.mubr.f32.mxu0 0.0
        %697 = vmatmul.mubr.f32.gmra.mrb[0].mxu0 %v505
        %v698 = vpop.f32.mrb[0].mxu0
        %v699 = vadd.f32 %v560, %v698
        %v700 = vpop.f32.mrb[0].mxu0
        %701 = vmatprep.mubr.f32.mxu0 0.0
        %702 = vmatmul.mubr.f32.gmra.mrb[0].mxu0 %v506
        %v703 = vpop.f32.mrb[0].mxu0
        %v704 = vadd.f32 %v560, %v703
        %v705 = vpop.f32.mrb[0].mxu0
        %706 = vdwg.mxu0
        %v707 = vld [vmem:[%s3] sm:$0xff]
        %v708 = vld [vmem:[%s3 + $0x8] sm:$0xff]
        %v709 = vld [vmem:[%s3 + $0x10] sm:$0xff]
        %v710 = vld [vmem:[%s3 + $0x18] sm:$0xff]
        %v711 = vld [vmem:[%s3 + $0x20] sm:$0xff]
        %v712 = vld [vmem:[%s3 + $0x28] sm:$0xff]
        %v713 = vld [vmem:[%s3 + $0x30] sm:$0xff]
        %v714 = vld [vmem:[%s3 + $0x38] sm:$0xff]
        %v715 = vld [vmem:[%s3 + $0x40] sm:$0xff]
        %v716 = vld [vmem:[%s3 + $0x48] sm:$0xff]
        %v717 = vld [vmem:[%s3 + $0x50] sm:$0xff]
        %v718 = vld [vmem:[%s3 + $0x58] sm:$0xff]
        %v719 = vld [vmem:[%s3 + $0x60] sm:$0xff]
        %v720 = vld [vmem:[%s3 + $0x68] sm:$0xff]
        %v721 = vld [vmem:[%s3 + $0x70] sm:$0xff]
        %v722 = vld [vmem:[%s3 + $0x78] sm:$0xff]
        %v723 = vmul.f32 %v707, %v507
        %v724 = vmul.f32 %v708, %v508
        %v725 = vmul.f32 %v709, %v509
        %v726 = vmul.f32 %v710, %v510
        %v727 = vmul.f32 %v711, %v511
        %v728 = vmul.f32 %v712, %v512
        %v729 = vmul.f32 %v713, %v513
        %v730 = vmul.f32 %v714, %v514
        %v731 = vmul.f32 %v715, %v515
        %v732 = vmul.f32 %v716, %v516
        %v733 = vmul.f32 %v717, %v517
        %v734 = vmul.f32 %v718, %v518
        %v735 = vmul.f32 %v719, %v519
        %v736 = vmul.f32 %v720, %v520
        %v737 = vmul.f32 %v721, %v521
        %v738 = vmul.f32 %v722, %v522
        %739 = vmatprep.subr.mxu0 0.0
        %740 = vmatpush1.msra.mxu0 %v723
        %741 = vmatprep.subr.mxu0 0.0
        %742 = vmatpush1.msra.mxu0 %v724
        %743 = vmatprep.subr.mxu0 0.0
        %744 = vmatpush1.msra.mxu0 %v725
        %745 = vmatprep.subr.mxu0 0.0
        %746 = vmatpush1.msra.mxu0 %v726
        %747 = vmatprep.subr.mxu0 0.0
        %748 = vmatpush1.msra.mxu0 %v727
        %749 = vmatprep.subr.mxu0 0.0
        %750 = vmatpush1.msra.mxu0 %v728
        %751 = vmatprep.subr.mxu0 0.0
        %752 = vmatpush1.msra.mxu0 %v729
        %753 = vmatprep.subr.mxu0 0.0
        %754 = vmatpush1.msra.mxu0 %v730
        %755 = vmatprep.subr.mxu0 0.0
        %756 = vmatpush1.msra.mxu0 %v731
        %757 = vmatprep.subr.mxu0 0.0
        %758 = vmatpush1.msra.mxu0 %v732
        %759 = vmatprep.subr.mxu0 0.0
        %760 = vmatpush1.msra.mxu0 %v733
        %761 = vmatprep.subr.mxu0 0.0
        %762 = vmatpush1.msra.mxu0 %v734
        %763 = vmatprep.subr.mxu0 0.0
        %764 = vmatpush1.msra.mxu0 %v735
        %765 = vmatprep.subr.mxu0 0.0
        %766 = vmatpush1.msra.mxu0 %v736
        %767 = vmatprep.subr.mxu0 0.0
        %768 = vmatpush1.msra.mxu0 %v737
        %769 = vmatprep.subr.mxu0 0.0
        %770 = vmatpush1.msra.mxu0 %v738
        %771 = vmatprep.subr.mxu0 0.0
        %772 = vmatpush1.msra.mxu0 0.0
        %773 = vmatprep.subr.mxu0 0.0
        %774 = vmatpush1.msra.mxu0 0.0
        %775 = vmatprep.subr.mxu0 0.0
        %776 = vmatpush1.msra.mxu0 0.0
        %777 = vmatprep.subr.mxu0 0.0
        %778 = vmatpush1.msra.mxu0 0.0
        %779 = vmatprep.subr.mxu0 0.0
        %780 = vmatpush1.msra.mxu0 0.0
        %781 = vmatprep.subr.mxu0 0.0
        %782 = vmatpush1.msra.mxu0 0.0
        %783 = vmatprep.subr.mxu0 0.0
        %784 = vmatpush1.msra.mxu0 0.0
        %785 = vmatprep.subr.mxu0 0.0
        %786 = vmatpush1.msra.mxu0 0.0
        %787 = vmatprep.subr.mxu0 0.0
        %788 = vmatpush1.msra.mxu0 0.0
        %789 = vmatprep.subr.mxu0 0.0
        %790 = vmatpush1.msra.mxu0 0.0
        %791 = vmatprep.subr.mxu0 0.0
        %792 = vmatpush1.msra.mxu0 0.0
        %793 = vmatprep.subr.mxu0 0.0
        %794 = vmatpush1.msra.mxu0 0.0
        %795 = vmatprep.subr.mxu0 0.0
        %796 = vmatpush1.msra.mxu0 0.0
        %797 = vmatprep.subr.mxu0 0.0
        %798 = vmatpush1.msra.mxu0 0.0
        %799 = vmatprep.subr.mxu0 0.0
        %800 = vmatpush1.msra.mxu0 0.0
        %801 = vmatprep.subr.mxu0 0.0
        %802 = vmatpush1.msra.mxu0 0.0
        %803 = vmatprep.mubr.f32.mxu0 0.0
        %804 = vmatmul.mubr.f32.gmra.mrb[0].mxu0 %v491
        %v805 = vpop.f32.mrb[0].mxu0
        %v806 = vadd.f32 0.0, %v805
        %v807 = vpop.f32.mrb[0].mxu0
        %808 = vmatprep.mubr.f32.mxu0 0.0
        %809 = vmatmul.mubr.f32.gmra.mrb[0].mxu0 %v492
        %v810 = vpop.f32.mrb[0].mxu0
        %v811 = vadd.f32 0.0, %v810
        %v812 = vpop.f32.mrb[0].mxu0
        %813 = vmatprep.mubr.f32.mxu0 0.0
        %814 = vmatmul.mubr.f32.gmra.mrb[0].mxu0 %v493
        %v815 = vpop.f32.mrb[0].mxu0
        %v816 = vadd.f32 0.0, %v815
        %v817 = vpop.f32.mrb[0].mxu0
        %818 = vmatprep.mubr.f32.mxu0 0.0
        %819 = vmatmul.mubr.f32.gmra.mrb[0].mxu0 %v494
        %v820 = vpop.f32.mrb[0].mxu0
        %v821 = vadd.f32 0.0, %v820
        %v822 = vpop.f32.mrb[0].mxu0
        %823 = vmatprep.mubr.f32.mxu0 0.0
        %824 = vmatmul.mubr.f32.gmra.mrb[0].mxu0 %v495
        %v825 = vpop.f32.mrb[0].mxu0
        %v826 = vadd.f32 0.0, %v825
        %v827 = vpop.f32.mrb[0].mxu0
        %828 = vmatprep.mubr.f32.mxu0 0.0
        %829 = vmatmul.mubr.f32.gmra.mrb[0].mxu0 %v496
        %v830 = vpop.f32.mrb[0].mxu0
        %v831 = vadd.f32 0.0, %v830
        %v832 = vpop.f32.mrb[0].mxu0
        %833 = vmatprep.mubr.f32.mxu0 0.0
        %834 = vmatmul.mubr.f32.gmra.mrb[0].mxu0 %v497
        %v835 = vpop.f32.mrb[0].mxu0
        %v836 = vadd.f32 0.0, %v835
        %v837 = vpop.f32.mrb[0].mxu0
        %838 = vmatprep.mubr.f32.mxu0 0.0
        %839 = vmatmul.mubr.f32.gmra.mrb[0].mxu0 %v498
        %v840 = vpop.f32.mrb[0].mxu0
        %v841 = vadd.f32 0.0, %v840
        %v842 = vpop.f32.mrb[0].mxu0
        %843 = vmatprep.mubr.f32.mxu0 0.0
        %844 = vmatmul.mubr.f32.gmra.mrb[0].mxu0 %v499
        %v845 = vpop.f32.mrb[0].mxu0
        %v846 = vadd.f32 0.0, %v845
        %v847 = vpop.f32.mrb[0].mxu0
        %848 = vmatprep.mubr.f32.mxu0 0.0
        %849 = vmatmul.mubr.f32.gmra.mrb[0].mxu0 %v500
        %v850 = vpop.f32.mrb[0].mxu0
        %v851 = vadd.f32 0.0, %v850
        %v852 = vpop.f32.mrb[0].mxu0
        %853 = vmatprep.mubr.f32.mxu0 0.0
        %854 = vmatmul.mubr.f32.gmra.mrb[0].mxu0 %v501
        %v855 = vpop.f32.mrb[0].mxu0
        %v856 = vadd.f32 0.0, %v855
        %v857 = vpop.f32.mrb[0].mxu0
        %858 = vmatprep.mubr.f32.mxu0 0.0
        %859 = vmatmul.mubr.f32.gmra.mrb[0].mxu0 %v502
        %v860 = vpop.f32.mrb[0].mxu0
        %v861 = vadd.f32 0.0, %v860
        %v862 = vpop.f32.mrb[0].mxu0
        %863 = vmatprep.mubr.f32.mxu0 0.0
        %864 = vmatmul.mubr.f32.gmra.mrb[0].mxu0 %v503
        %v865 = vpop.f32.mrb[0].mxu0
        %v866 = vadd.f32 0.0, %v865
        %v867 = vpop.f32.mrb[0].mxu0
        %868 = vmatprep.mubr.f32.mxu0 0.0
        %869 = vmatmul.mubr.f32.gmra.mrb[0].mxu0 %v504
        %v870 = vpop.f32.mrb[0].mxu0
        %v871 = vadd.f32 0.0, %v870
        %v872 = vpop.f32.mrb[0].mxu0
        %873 = vmatprep.mubr.f32.mxu0 0.0
        %874 = vmatmul.mubr.f32.gmra.mrb[0].mxu0 %v505
        %v875 = vpop.f32.mrb[0].mxu0
        %v876 = vadd.f32 0.0, %v875
        %v877 = vpop.f32.mrb[0].mxu0
        %878 = vmatprep.mubr.f32.mxu0 0.0
        %879 = vmatmul.mubr.f32.gmra.mrb[0].mxu0 %v506
        %v880 = vpop.f32.mrb[0].mxu0
        %v881 = vadd.f32 0.0, %v880
        %v882 = vpop.f32.mrb[0].mxu0
        %883 = vdwg.mxu0
        %v884 = vadd.f32 %v629, %v806
        %v885 = vadd.f32 %v634, %v811
        %v886 = vadd.f32 %v639, %v816
        %v887 = vadd.f32 %v644, %v821
        %v888 = vadd.f32 %v649, %v826
        %v889 = vadd.f32 %v654, %v831
        %v890 = vadd.f32 %v659, %v836
        %v891 = vadd.f32 %v664, %v841
        %v892 = vadd.f32 %v669, %v846
        %v893 = vadd.f32 %v674, %v851
        %v894 = vadd.f32 %v679, %v856
        %v895 = vadd.f32 %v684, %v861
        %v896 = vadd.f32 %v689, %v866
        %v897 = vadd.f32 %v694, %v871
        %v898 = vadd.f32 %v699, %v876
        %v899 = vadd.f32 %v704, %v881
        %v900 = vtanh.pop %v884
        %v901 = vtanh.pop %v885
        %v902 = vtanh.pop %v886
        %v903 = vtanh.pop %v887
        %v904 = vtanh.pop %v888
        %v905 = vtanh.pop %v889
        %v906 = vtanh.pop %v890
        %v907 = vtanh.pop %v891
        %v908 = vtanh.pop %v892
        %v909 = vtanh.pop %v893
        %v910 = vtanh.pop %v894
        %v911 = vtanh.pop %v895
        %v912 = vtanh.pop %v896
        %v913 = vtanh.pop %v897
        %v914 = vtanh.pop %v898
        %v915 = vtanh.pop %v899
        %916 = vst [vmem:[%s422] sm:$0xff] %v900
        %917 = vst [vmem:[%s422 + $0x8] sm:$0xff] %v901
        %918 = vst [vmem:[%s422 + $0x10] sm:$0xff] %v902
        %919 = vst [vmem:[%s422 + $0x18] sm:$0xff] %v903
        %920 = vst [vmem:[%s422 + $0x20] sm:$0xff] %v904
        %921 = vst [vmem:[%s422 + $0x28] sm:$0xff] %v905
        %922 = vst [vmem:[%s422 + $0x30] sm:$0xff] %v906
        %923 = vst [vmem:[%s422 + $0x38] sm:$0xff] %v907
        %924 = vst [vmem:[%s422 + $0x40] sm:$0xff] %v908
        %925 = vst [vmem:[%s422 + $0x48] sm:$0xff] %v909
        %926 = vst [vmem:[%s422 + $0x50] sm:$0xff] %v910
        %927 = vst [vmem:[%s422 + $0x58] sm:$0xff] %v911
        %928 = vst [vmem:[%s422 + $0x60] sm:$0xff] %v912
        %929 = vst [vmem:[%s422 + $0x68] sm:$0xff] %v913
        %930 = vst [vmem:[%s422 + $0x70] sm:$0xff] %v914
        %931 = vst [vmem:[%s422 + $0x78] sm:$0xff] %v915
        %s932 = sld [smem:[#allocation2 + $0x1]]
        %v933 = vld [vmem:[%s6] sm:$0x1]
        %v935 = vlaneseq
        %v936 = vshrl.u32 %v935, 7
        %v937 = vsub.s32 0, %v936
        %v938 = vrot.slane %v933, %v937
        %v940 = vmul.f32 %v900, %v938
        %v941 = vmul.f32 %v901, %v938
        %v942 = vmul.f32 %v902, %v938
        %v943 = vmul.f32 %v903, %v938
        %v944 = vmul.f32 %v904, %v938
        %v945 = vmul.f32 %v905, %v938
        %v946 = vmul.f32 %v906, %v938
        %v947 = vmul.f32 %v907, %v938
        %v948 = vmul.f32 %v908, %v938
        %v949 = vmul.f32 %v909, %v938
        %v950 = vmul.f32 %v910, %v938
        %v951 = vmul.f32 %v911, %v938
        %v952 = vmul.f32 %v912, %v938
        %v953 = vmul.f32 %v913, %v938
        %v954 = vmul.f32 %v914, %v938
        %v955 = vmul.f32 %v915, %v938
        %956 = vadd.xlane.f32.xlu0 %v940
        %v957 = vpop.xlane.xlu0 %956
        %958 = vadd.xlane.f32.xlu0 %v941
        %v959 = vpop.xlane.xlu0 %958
        %960 = vadd.xlane.f32.xlu0 %v942
        %v961 = vpop.xlane.xlu0 %960
        %962 = vadd.xlane.f32.xlu0 %v943
        %v963 = vpop.xlane.xlu0 %962
        %964 = vadd.xlane.f32.xlu0 %v944
        %v965 = vpop.xlane.xlu0 %964
        %966 = vadd.xlane.f32.xlu0 %v945
        %v967 = vpop.xlane.xlu0 %966
        %968 = vadd.xlane.f32.xlu0 %v946
        %v969 = vpop.xlane.xlu0 %968
        %970 = vadd.xlane.f32.xlu0 %v947
        %v971 = vpop.xlane.xlu0 %970
        %972 = vadd.xlane.f32.xlu0 %v948
        %v973 = vpop.xlane.xlu0 %972
        %974 = vadd.xlane.f32.xlu0 %v949
        %v975 = vpop.xlane.xlu0 %974
        %976 = vadd.xlane.f32.xlu0 %v950
        %v977 = vpop.xlane.xlu0 %976
        %978 = vadd.xlane.f32.xlu0 %v951
        %v979 = vpop.xlane.xlu0 %978
        %980 = vadd.xlane.f32.xlu0 %v952
        %v981 = vpop.xlane.xlu0 %980
        %982 = vadd.xlane.f32.xlu0 %v953
        %v983 = vpop.xlane.xlu0 %982
        %984 = vadd.xlane.f32.xlu0 %v954
        %v985 = vpop.xlane.xlu0 %984
        %986 = vadd.xlane.f32.xlu0 %v955
        %v987 = vpop.xlane.xlu0 %986
        %v988 = vstv %s932
        %v989 = vadd.f32 %v957, %v988
        %v990 = vadd.f32 %v959, %v988
        %v991 = vadd.f32 %v961, %v988
        %v992 = vadd.f32 %v963, %v988
        %v993 = vadd.f32 %v965, %v988
        %v994 = vadd.f32 %v967, %v988
        %v995 = vadd.f32 %v969, %v988
        %v996 = vadd.f32 %v971, %v988
        %v997 = vadd.f32 %v973, %v988
        %v998 = vadd.f32 %v975, %v988
        %v999 = vadd.f32 %v977, %v988
        %v1000 = vadd.f32 %v979, %v988
        %v1001 = vadd.f32 %v981, %v988
        %v1002 = vadd.f32 %v983, %v988
        %v1003 = vadd.f32 %v985, %v988
        %v1004 = vadd.f32 %v987, %v988
        %v1005 = vtanh.pop %v989
        %v1006 = vtanh.pop %v990
        %v1007 = vtanh.pop %v991
        %v1008 = vtanh.pop %v992
        %v1009 = vtanh.pop %v993
        %v1010 = vtanh.pop %v994
        %v1011 = vtanh.pop %v995
        %v1012 = vtanh.pop %v996
        %v1013 = vtanh.pop %v997
        %v1014 = vtanh.pop %v998
        %v1015 = vtanh.pop %v999
        %v1016 = vtanh.pop %v1000
        %v1017 = vtanh.pop %v1001
        %v1018 = vtanh.pop %v1002
        %v1019 = vtanh.pop %v1003
        %v1020 = vtanh.pop %v1004
        %v1021 = vld [vmem:[%s7] sm:$0x1]
        %v1023 = vlaneseq
        %v1024 = vshrl.u32 %v1023, 7
        %v1025 = vsub.s32 0, %v1024
        %v1026 = vrot.slane %v1021, %v1025
        %v1028 = vmul.f32 %v1005, %v1026
        %v1029 = vmul.f32 %v1006, %v1026
        %v1030 = vmul.f32 %v1007, %v1026
        %v1031 = vmul.f32 %v1008, %v1026
        %v1032 = vmul.f32 %v1009, %v1026
        %v1033 = vmul.f32 %v1010, %v1026
        %v1034 = vmul.f32 %v1011, %v1026
        %v1035 = vmul.f32 %v1012, %v1026
        %v1036 = vmul.f32 %v1013, %v1026
        %v1037 = vmul.f32 %v1014, %v1026
        %v1038 = vmul.f32 %v1015, %v1026
        %v1039 = vmul.f32 %v1016, %v1026
        %v1040 = vmul.f32 %v1017, %v1026
        %v1041 = vmul.f32 %v1018, %v1026
        %v1042 = vmul.f32 %v1019, %v1026
        %v1043 = vmul.f32 %v1020, %v1026
        %v1044 = vld [vmem:[%s8] sm:$0x1]
        %v1046 = vlaneseq
        %v1047 = vshrl.u32 %v1046, 7
        %v1048 = vsub.s32 0, %v1047
        %v1049 = vrot.slane %v1044, %v1048
        %v1051 = vadd.f32 %v1028, %v1049
        %v1052 = vadd.f32 %v1029, %v1049
        %v1053 = vadd.f32 %v1030, %v1049
        %v1054 = vadd.f32 %v1031, %v1049
        %v1055 = vadd.f32 %v1032, %v1049
        %v1056 = vadd.f32 %v1033, %v1049
        %v1057 = vadd.f32 %v1034, %v1049
        %v1058 = vadd.f32 %v1035, %v1049
        %v1059 = vadd.f32 %v1036, %v1049
        %v1060 = vadd.f32 %v1037, %v1049
        %v1061 = vadd.f32 %v1038, %v1049
        %v1062 = vadd.f32 %v1039, %v1049
        %v1063 = vadd.f32 %v1040, %v1049
        %v1064 = vadd.f32 %v1041, %v1049
        %v1065 = vadd.f32 %v1042, %v1049
        %v1066 = vadd.f32 %v1043, %v1049
        %v1067 = vmul.f32 %v1051, %v523
        %v1068 = vmul.f32 %v1052, %v524
        %v1069 = vmul.f32 %v1053, %v525
        %v1070 = vmul.f32 %v1054, %v526
        %v1071 = vmul.f32 %v1055, %v527
        %v1072 = vmul.f32 %v1056, %v528
        %v1073 = vmul.f32 %v1057, %v529
        %v1074 = vmul.f32 %v1058, %v530
        %v1075 = vmul.f32 %v1059, %v531
        %v1076 = vmul.f32 %v1060, %v532
        %v1077 = vmul.f32 %v1061, %v533
        %v1078 = vmul.f32 %v1062, %v534
        %v1079 = vmul.f32 %v1063, %v535
        %v1080 = vmul.f32 %v1064, %v536
        %v1081 = vmul.f32 %v1065, %v537
        %v1082 = vmul.f32 %v1066, %v538
        %v1083 = vadd.f32 %v507, %v1067
        %v1084 = vadd.f32 %v508, %v1068
        %v1085 = vadd.f32 %v509, %v1069
        %v1086 = vadd.f32 %v510, %v1070
        %v1087 = vadd.f32 %v511, %v1071
        %v1088 = vadd.f32 %v512, %v1072
        %v1089 = vadd.f32 %v513, %v1073
        %v1090 = vadd.f32 %v514, %v1074
        %v1091 = vadd.f32 %v515, %v1075
        %v1092 = vadd.f32 %v516, %v1076
        %v1093 = vadd.f32 %v517, %v1077
        %v1094 = vadd.f32 %v518, %v1078
        %v1095 = vadd.f32 %v519, %v1079
        %v1096 = vadd.f32 %v520, %v1080
        %v1097 = vadd.f32 %v521, %v1081
        %v1098 = vadd.f32 %v522, %v1082
        %v1099 = vmax.f32 %v1083, -2.0
        %v1100 = vmax.f32 %v1084, -2.0
        %v1101 = vmax.f32 %v1085, -2.0
        %v1102 = vmax.f32 %v1086, -2.0
        %v1103 = vmax.f32 %v1087, -2.0
        %v1104 = vmax.f32 %v1088, -2.0
        %v1105 = vmax.f32 %v1089, -2.0
        %v1106 = vmax.f32 %v1090, -2.0
        %v1107 = vmax.f32 %v1091, -2.0
        %v1108 = vmax.f32 %v1092, -2.0
        %v1109 = vmax.f32 %v1093, -2.0
        %v1110 = vmax.f32 %v1094, -2.0
        %v1111 = vmax.f32 %v1095, -2.0
        %v1112 = vmax.f32 %v1096, -2.0
        %v1113 = vmax.f32 %v1097, -2.0
        %v1114 = vmax.f32 %v1098, -2.0
        %v1115 = vmin.f32 %v1099, 2.0
        %v1116 = vmin.f32 %v1100, 2.0
        %v1117 = vmin.f32 %v1101, 2.0
        %v1118 = vmin.f32 %v1102, 2.0
        %v1119 = vmin.f32 %v1103, 2.0
        %v1120 = vmin.f32 %v1104, 2.0
        %v1121 = vmin.f32 %v1105, 2.0
        %v1122 = vmin.f32 %v1106, 2.0
        %v1123 = vmin.f32 %v1107, 2.0
        %v1124 = vmin.f32 %v1108, 2.0
        %v1125 = vmin.f32 %v1109, 2.0
        %v1126 = vmin.f32 %v1110, 2.0
        %v1127 = vmin.f32 %v1111, 2.0
        %v1128 = vmin.f32 %v1112, 2.0
        %v1129 = vmin.f32 %v1113, 2.0
        %v1130 = vmin.f32 %v1114, 2.0
        %1131 = vst [vmem:[%s11] sm:$0xff] %v1115
        %1132 = vst [vmem:[%s11 + $0x8] sm:$0xff] %v1116
        %1133 = vst [vmem:[%s11 + $0x10] sm:$0xff] %v1117
        %1134 = vst [vmem:[%s11 + $0x18] sm:$0xff] %v1118
        %1135 = vst [vmem:[%s11 + $0x20] sm:$0xff] %v1119
        %1136 = vst [vmem:[%s11 + $0x28] sm:$0xff] %v1120
        %1137 = vst [vmem:[%s11 + $0x30] sm:$0xff] %v1121
        %1138 = vst [vmem:[%s11 + $0x38] sm:$0xff] %v1122
        %1139 = vst [vmem:[%s11 + $0x40] sm:$0xff] %v1123
        %1140 = vst [vmem:[%s11 + $0x48] sm:$0xff] %v1124
        %1141 = vst [vmem:[%s11 + $0x50] sm:$0xff] %v1125
        %1142 = vst [vmem:[%s11 + $0x58] sm:$0xff] %v1126
        %1143 = vst [vmem:[%s11 + $0x60] sm:$0xff] %v1127
        %1144 = vst [vmem:[%s11 + $0x68] sm:$0xff] %v1128
        %1145 = vst [vmem:[%s11 + $0x70] sm:$0xff] %v1129
        %1146 = vst [vmem:[%s11 + $0x78] sm:$0xff] %v1130
        %s1147 = sld [smem:[#allocation2]]
        %s1148 = ssub.f32 1.0, %s1147
        %v1149 = vstv %s1148
        %v1150 = vmul.f32 %v1149, %v523
        %v1151 = vmul.f32 %v1149, %v524
        %v1152 = vmul.f32 %v1149, %v525
        %v1153 = vmul.f32 %v1149, %v526
        %v1154 = vmul.f32 %v1149, %v527
        %v1155 = vmul.f32 %v1149, %v528
        %v1156 = vmul.f32 %v1149, %v529
        %v1157 = vmul.f32 %v1149, %v530
        %v1158 = vmul.f32 %v1149, %v531
        %v1159 = vmul.f32 %v1149, %v532
        %v1160 = vmul.f32 %v1149, %v533
        %v1161 = vmul.f32 %v1149, %v534
        %v1162 = vmul.f32 %v1149, %v535
        %v1163 = vmul.f32 %v1149, %v536
        %v1164 = vmul.f32 %v1149, %v537
        %v1165 = vmul.f32 %v1149, %v538
        %1166 = vmatprep.subr.mxu0 0.0
        %1167 = vmatpush1.msra.mxu0 %v900
        %1168 = vmatprep.subr.mxu0 0.0
        %1169 = vmatpush1.msra.mxu0 %v901
        %1170 = vmatprep.subr.mxu0 0.0
        %1171 = vmatpush1.msra.mxu0 %v902
        %1172 = vmatprep.subr.mxu0 0.0
        %1173 = vmatpush1.msra.mxu0 %v903
        %1174 = vmatprep.subr.mxu0 0.0
        %1175 = vmatpush1.msra.mxu0 %v904
        %1176 = vmatprep.subr.mxu0 0.0
        %1177 = vmatpush1.msra.mxu0 %v905
        %1178 = vmatprep.subr.mxu0 0.0
        %1179 = vmatpush1.msra.mxu0 %v906
        %1180 = vmatprep.subr.mxu0 0.0
        %1181 = vmatpush1.msra.mxu0 %v907
        %1182 = vmatprep.subr.mxu0 0.0
        %1183 = vmatpush1.msra.mxu0 %v908
        %1184 = vmatprep.subr.mxu0 0.0
        %1185 = vmatpush1.msra.mxu0 %v909
        %1186 = vmatprep.subr.mxu0 0.0
        %1187 = vmatpush1.msra.mxu0 %v910
        %1188 = vmatprep.subr.mxu0 0.0
        %1189 = vmatpush1.msra.mxu0 %v911
        %1190 = vmatprep.subr.mxu0 0.0
        %1191 = vmatpush1.msra.mxu0 %v912
        %1192 = vmatprep.subr.mxu0 0.0
        %1193 = vmatpush1.msra.mxu0 %v913
        %1194 = vmatprep.subr.mxu0 0.0
        %1195 = vmatpush1.msra.mxu0 %v914
        %1196 = vmatprep.subr.mxu0 0.0
        %1197 = vmatpush1.msra.mxu0 %v915
        %1198 = vmatprep.subr.mxu0 0.0
        %1199 = vmatpush1.msra.mxu0 0.0
        %1200 = vmatprep.subr.mxu0 0.0
        %1201 = vmatpush1.msra.mxu0 0.0
        %1202 = vmatprep.subr.mxu0 0.0
        %1203 = vmatpush1.msra.mxu0 0.0
        %1204 = vmatprep.subr.mxu0 0.0
        %1205 = vmatpush1.msra.mxu0 0.0
        %1206 = vmatprep.subr.mxu0 0.0
        %1207 = vmatpush1.msra.mxu0 0.0
        %1208 = vmatprep.subr.mxu0 0.0
        %1209 = vmatpush1.msra.mxu0 0.0
        %1210 = vmatprep.subr.mxu0 0.0
        %1211 = vmatpush1.msra.mxu0 0.0
        %1212 = vmatprep.subr.mxu0 0.0
        %1213 = vmatpush1.msra.mxu0 0.0
        %1214 = vmatprep.subr.mxu0 0.0
        %1215 = vmatpush1.msra.mxu0 0.0
        %1216 = vmatprep.subr.mxu0 0.0
        %1217 = vmatpush1.msra.mxu0 0.0
        %1218 = vmatprep.subr.mxu0 0.0
        %1219 = vmatpush1.msra.mxu0 0.0
        %1220 = vmatprep.subr.mxu0 0.0
        %1221 = vmatpush1.msra.mxu0 0.0
        %1222 = vmatprep.subr.mxu0 0.0
        %1223 = vmatpush1.msra.mxu0 0.0
        %1224 = vmatprep.subr.mxu0 0.0
        %1225 = vmatpush1.msra.mxu0 0.0
        %1226 = vmatprep.subr.mxu0 0.0
        %1227 = vmatpush1.msra.mxu0 0.0
        %1228 = vmatprep.subr.mxu0 0.0
        %1229 = vmatpush1.msra.mxu0 0.0
        %1230 = vmatprep.mubr.f32.mxu0 0.0
        %1231 = vmatmul.mubr.f32.gmra.mrb[0].mxu0 %v491
        %v1232 = vpop.f32.mrb[0].mxu0
        %v1233 = vadd.f32 0.0, %v1232
        %v1234 = vpop.f32.mrb[0].mxu0
        %1235 = vmatprep.mubr.f32.mxu0 0.0
        %1236 = vmatmul.mubr.f32.gmra.mrb[0].mxu0 %v492
        %v1237 = vpop.f32.mrb[0].mxu0
        %v1238 = vadd.f32 0.0, %v1237
        %v1239 = vpop.f32.mrb[0].mxu0
        %1240 = vmatprep.mubr.f32.mxu0 0.0
        %1241 = vmatmul.mubr.f32.gmra.mrb[0].mxu0 %v493
        %v1242 = vpop.f32.mrb[0].mxu0
        %v1243 = vadd.f32 0.0, %v1242
        %v1244 = vpop.f32.mrb[0].mxu0
        %1245 = vmatprep.mubr.f32.mxu0 0.0
        %1246 = vmatmul.mubr.f32.gmra.mrb[0].mxu0 %v494
        %v1247 = vpop.f32.mrb[0].mxu0
        %v1248 = vadd.f32 0.0, %v1247
        %v1249 = vpop.f32.mrb[0].mxu0
        %1250 = vmatprep.mubr.f32.mxu0 0.0
        %1251 = vmatmul.mubr.f32.gmra.mrb[0].mxu0 %v495
        %v1252 = vpop.f32.mrb[0].mxu0
        %v1253 = vadd.f32 0.0, %v1252
        %v1254 = vpop.f32.mrb[0].mxu0
        %1255 = vmatprep.mubr.f32.mxu0 0.0
        %1256 = vmatmul.mubr.f32.gmra.mrb[0].mxu0 %v496
        %v1257 = vpop.f32.mrb[0].mxu0
        %v1258 = vadd.f32 0.0, %v1257
        %v1259 = vpop.f32.mrb[0].mxu0
        %1260 = vmatprep.mubr.f32.mxu0 0.0
        %1261 = vmatmul.mubr.f32.gmra.mrb[0].mxu0 %v497
        %v1262 = vpop.f32.mrb[0].mxu0
        %v1263 = vadd.f32 0.0, %v1262
        %v1264 = vpop.f32.mrb[0].mxu0
        %1265 = vmatprep.mubr.f32.mxu0 0.0
        %1266 = vmatmul.mubr.f32.gmra.mrb[0].mxu0 %v498
        %v1267 = vpop.f32.mrb[0].mxu0
        %v1268 = vadd.f32 0.0, %v1267
        %v1269 = vpop.f32.mrb[0].mxu0
        %1270 = vmatprep.mubr.f32.mxu0 0.0
        %1271 = vmatmul.mubr.f32.gmra.mrb[0].mxu0 %v499
        %v1272 = vpop.f32.mrb[0].mxu0
        %v1273 = vadd.f32 0.0, %v1272
        %v1274 = vpop.f32.mrb[0].mxu0
        %1275 = vmatprep.mubr.f32.mxu0 0.0
        %1276 = vmatmul.mubr.f32.gmra.mrb[0].mxu0 %v500
        %v1277 = vpop.f32.mrb[0].mxu0
        %v1278 = vadd.f32 0.0, %v1277
        %v1279 = vpop.f32.mrb[0].mxu0
        %1280 = vmatprep.mubr.f32.mxu0 0.0
        %1281 = vmatmul.mubr.f32.gmra.mrb[0].mxu0 %v501
        %v1282 = vpop.f32.mrb[0].mxu0
        %v1283 = vadd.f32 0.0, %v1282
        %v1284 = vpop.f32.mrb[0].mxu0
        %1285 = vmatprep.mubr.f32.mxu0 0.0
        %1286 = vmatmul.mubr.f32.gmra.mrb[0].mxu0 %v502
        %v1287 = vpop.f32.mrb[0].mxu0
        %v1288 = vadd.f32 0.0, %v1287
        %v1289 = vpop.f32.mrb[0].mxu0
        %1290 = vmatprep.mubr.f32.mxu0 0.0
        %1291 = vmatmul.mubr.f32.gmra.mrb[0].mxu0 %v503
        %v1292 = vpop.f32.mrb[0].mxu0
        %v1293 = vadd.f32 0.0, %v1292
        %v1294 = vpop.f32.mrb[0].mxu0
        %1295 = vmatprep.mubr.f32.mxu0 0.0
        %1296 = vmatmul.mubr.f32.gmra.mrb[0].mxu0 %v504
        %v1297 = vpop.f32.mrb[0].mxu0
        %v1298 = vadd.f32 0.0, %v1297
        %v1299 = vpop.f32.mrb[0].mxu0
        %1300 = vmatprep.mubr.f32.mxu0 0.0
        %1301 = vmatmul.mubr.f32.gmra.mrb[0].mxu0 %v505
        %v1302 = vpop.f32.mrb[0].mxu0
        %v1303 = vadd.f32 0.0, %v1302
        %v1304 = vpop.f32.mrb[0].mxu0
        %1305 = vmatprep.mubr.f32.mxu0 0.0
        %1306 = vmatmul.mubr.f32.gmra.mrb[0].mxu0 %v506
        %v1307 = vpop.f32.mrb[0].mxu0
        %v1308 = vadd.f32 0.0, %v1307
        %v1309 = vpop.f32.mrb[0].mxu0
        %1310 = vdwg.mxu0
        %v1311 = vstv %s1147
        %v1312 = vmul.f32 %v1311, %v1233
        %v1313 = vmul.f32 %v1311, %v1238
        %v1314 = vmul.f32 %v1311, %v1243
        %v1315 = vmul.f32 %v1311, %v1248
        %v1316 = vmul.f32 %v1311, %v1253
        %v1317 = vmul.f32 %v1311, %v1258
        %v1318 = vmul.f32 %v1311, %v1263
        %v1319 = vmul.f32 %v1311, %v1268
        %v1320 = vmul.f32 %v1311, %v1273
        %v1321 = vmul.f32 %v1311, %v1278
        %v1322 = vmul.f32 %v1311, %v1283
        %v1323 = vmul.f32 %v1311, %v1288
        %v1324 = vmul.f32 %v1311, %v1293
        %v1325 = vmul.f32 %v1311, %v1298
        %v1326 = vmul.f32 %v1311, %v1303
        %v1327 = vmul.f32 %v1311, %v1308
        %v1328 = vadd.f32 %v1150, %v1312
        %v1329 = vadd.f32 %v1151, %v1313
        %v1330 = vadd.f32 %v1152, %v1314
        %v1331 = vadd.f32 %v1153, %v1315
        %v1332 = vadd.f32 %v1154, %v1316
        %v1333 = vadd.f32 %v1155, %v1317
        %v1334 = vadd.f32 %v1156, %v1318
        %v1335 = vadd.f32 %v1157, %v1319
        %v1336 = vadd.f32 %v1158, %v1320
        %v1337 = vadd.f32 %v1159, %v1321
        %v1338 = vadd.f32 %v1160, %v1322
        %v1339 = vadd.f32 %v1161, %v1323
        %v1340 = vadd.f32 %v1162, %v1324
        %v1341 = vadd.f32 %v1163, %v1325
        %v1342 = vadd.f32 %v1164, %v1326
        %v1343 = vadd.f32 %v1165, %v1327
        %1344 = vst [vmem:[%s12] sm:$0xff] %v1328
        %1345 = vst [vmem:[%s12 + $0x8] sm:$0xff] %v1329
        %1346 = vst [vmem:[%s12 + $0x10] sm:$0xff] %v1330
        %1347 = vst [vmem:[%s12 + $0x18] sm:$0xff] %v1331
        %1348 = vst [vmem:[%s12 + $0x20] sm:$0xff] %v1332
        %1349 = vst [vmem:[%s12 + $0x28] sm:$0xff] %v1333
        %1350 = vst [vmem:[%s12 + $0x30] sm:$0xff] %v1334
        %1351 = vst [vmem:[%s12 + $0x38] sm:$0xff] %v1335
        %1352 = vst [vmem:[%s12 + $0x40] sm:$0xff] %v1336
        %1353 = vst [vmem:[%s12 + $0x48] sm:$0xff] %v1337
        %1354 = vst [vmem:[%s12 + $0x50] sm:$0xff] %v1338
        %1355 = vst [vmem:[%s12 + $0x58] sm:$0xff] %v1339
        %1356 = vst [vmem:[%s12 + $0x60] sm:$0xff] %v1340
        %1357 = vst [vmem:[%s12 + $0x68] sm:$0xff] %v1341
        %1358 = vst [vmem:[%s12 + $0x70] sm:$0xff] %v1342
        %1359 = vst [vmem:[%s12 + $0x78] sm:$0xff] %v1343
        %p1360 = scmp.lt.s32.totalorder %s25, 3
        %s1361 = scalar_select %p1360, %s25, 3
        %s1362 = smul.addr %s1361, 16
        %s1363 = smul.addr %s1362, 8
        %s1364 = scalar_lea.vmem %s10, %s1363
        // Predicated region
        $region69: #{eligibility_rollout.1} parent=59 // pred_check
          %p1365 = pneg %p258
        $region70: #{eligibility_rollout.1} parent=59 // pred_check_branch
          %1367 = sbr.rel (%p1365) target = $region72
        $region71: #{eligibility_rollout.1} parent=59 // pred_region
          _
        $region72: #{eligibility_rollout.1} parent=59 // pred_fallthru
          _
        // Predicated region
        $region73: #{eligibility_rollout.1} parent=59 // pred_check
          %p1368 = pneg %p279
        $region74: #{eligibility_rollout.1} parent=59 // pred_check_branch
          %1370 = sbr.rel (%p1368) target = $region76
        $region75: #{eligibility_rollout.1} parent=59 // pred_region
          _
        $region76: #{eligibility_rollout.1} parent=59 // pred_fallthru
          _
        // Predicated region
        $region77: #{eligibility_rollout.1} parent=59 // pred_check
          %p1371 = pneg %p300
        $region78: #{eligibility_rollout.1} parent=59 // pred_check_branch
          %1373 = sbr.rel (%p1371) target = $region80
        $region79: #{eligibility_rollout.1} parent=59 // pred_region
          _
        $region80: #{eligibility_rollout.1} parent=59 // pred_fallthru
          _
        // Predicated region
        $region81: #{eligibility_rollout.1} parent=59 // pred_check
          %p1374 = pneg %p279
        $region82: #{eligibility_rollout.1} parent=59 // pred_check_branch
          %1376 = sbr.rel (%p1374) target = $region84
        $region83: #{eligibility_rollout.1} parent=59 // pred_region
          _
        $region84: #{eligibility_rollout.1} parent=59 // pred_fallthru
          _
        // Predicated region
        $region85: #{eligibility_rollout.1} parent=59 // pred_check
          %p1377 = pneg %p300
        $region86: #{eligibility_rollout.1} parent=59 // pred_check_branch
          %1379 = sbr.rel (%p1377) target = $region88
        $region87: #{eligibility_rollout.1} parent=59 // pred_region
          _
        $region88: #{eligibility_rollout.1} parent=59 // pred_fallthru
          _
      $region60: #{eligibility_rollout.1} parent=5 // pred_fallthru
        _
      %p1380 = scmp.le.s32.totalorder 2, %s20
      // Predicated region
      $region89: #{eligibility_rollout.1} parent=5 // pred_check
        %p1381 = pneg %p1380
      $region90: #{eligibility_rollout.1} parent=5 // pred_check_branch
        %1383 = sbr.rel (%p1381) target = $region92
      $region91: #{eligibility_rollout.1} parent=5 // pred_region
        %s1384 = ssub.s32 %s20, 2
        // Predicated region
        $region93: #{eligibility_rollout.1} parent=91 // pred_check
          %p1385 = pneg %p264
        $region94: #{eligibility_rollout.1} parent=91 // pred_check_branch
          %1387 = sbr.rel (%p1385) target = $region96
        $region95: #{eligibility_rollout.1} parent=91 // pred_region
          %p1388 = scmp.lt.s32.totalorder %s26, 3
          %s1389 = scalar_select %p1388, %s26, 3
          %s1390 = smul.addr %s1389, 16
          %s1391 = smul.addr %s1390, 8
          %s1392 = scalar_lea.vmem %s10, %s1391
        $region96: #{eligibility_rollout.1} parent=91 // pred_fallthru
          _
      $region92: #{eligibility_rollout.1} parent=5 // pred_fallthru
        _
    $region6: #{eligibility_rollout.1} parent=1 // loop_footer
      %s24 = sadd.s32 1, %s20
    $region7: #{eligibility_rollout.1} parent=1 // loop_footer_branch
      %19 = sbr.rel target = $region3
    $region8: #{eligibility_rollout.1} parent=1 // loop_exit
      _
    %1393 = vsyncpa [#allocation3], 1
    %s1394 = scalar_lea.sflag [#allocation3], 1
    %1395 = vsyncpa %s1394, 1

</llo_original>
